<compile_context>
chip_gen: v7x
topology: tpu7x:2x2x1
jax: 0.10.0
libtpu: 0.0.40
codegen_flags: <defaults>
</compile_context>

<pallas_src>
import functools

import jax
import jax.numpy as jnp
from jax import lax
from jax.experimental import pallas as pl
from jax.experimental.pallas import tpu as pltpu


def _self_attention_kernel(xkv_ref, wq_ref, wkv_ref, wo_ref, bo_ref,
                           o_ref, kv_ref, acc_ref,
                           *, num_heads: int, dhp: int, q_tile: int):
    """One grid step = one (batch element, query tile).

    xkv_ref : (1, ns, D)        full sequence of x for this batch element
    wq_ref  : (D, H*dhp)        W_q^T, pre-transposed, scale folded, head-padded
    wkv_ref : (D, 2*H*dhp)      [W_k^T | W_v^T], pre-transposed, head-padded
    wo_ref  : (H*dhp, D)        W_out^T, pre-transposed, head-padded rows
    bo_ref  : (1, D)            proj_out bias (f32)
    o_ref   : (1, tq, D)        output tile
    kv_ref  : (ns, 2*H*dhp)     persistent VMEM scratch: [K | V] for this batch
    acc_ref : (tq, H*dhp) f32   per-head output accumulator scratch
    """
    kdim = num_heads * dhp

    # K/V projection for the whole sequence: once per batch element (qi == 0).
    @pl.when(pl.program_id(1) == 0)
    def _():
        kv_ref[...] = jnp.dot(
            xkv_ref[0], wkv_ref[...],
            preferred_element_type=jnp.float32).astype(kv_ref.dtype)

    # Query rows for this tile, sliced from the already-resident x block.
    start = pl.multiple_of(pl.program_id(1) * q_tile, q_tile)
    xq = xkv_ref[0, pl.ds(start, q_tile), :]                       # (tq, D)
    q = jnp.dot(xq, wq_ref[...],
                preferred_element_type=jnp.float32).astype(xq.dtype)  # (tq, H*dhp)

    for h in range(num_heads):
        q_h = q[:, h * dhp:(h + 1) * dhp]                          # (tq, dhp)
        k_h = kv_ref[:, h * dhp:(h + 1) * dhp]                     # (ns, dhp)
        v_h = kv_ref[:, kdim + h * dhp: kdim + (h + 1) * dhp]      # (ns, dhp)

        # scores = q_h @ k_h^T without a transpose: contract dhp directly.
        # 1/sqrt(dh) is already folded into W_q; zero-padded head columns add 0.
        s = lax.dot_general(
            q_h, k_h,
            dimension_numbers=(((1,), (1,)), ((), ())),
            preferred_element_type=jnp.float32)                    # (tq, ns) f32

        # Numerically stable softmax with deferred normalization.
        m = jnp.max(s, axis=-1, keepdims=True)
        e = jnp.exp(s - m)
        pv = jnp.dot(e.astype(v_h.dtype), v_h,
                     preferred_element_type=jnp.float32)           # (tq, dhp) f32
        inv = pl.reciprocal(jnp.sum(e, axis=-1, keepdims=True), approx=True)
        acc_ref[:, h * dhp:(h + 1) * dhp] = pv * inv

    # Output projection (weights pre-transposed) + bias, f32 accumulation.
    out = jnp.dot(acc_ref[...].astype(wo_ref.dtype), wo_ref[...],
                  preferred_element_type=jnp.float32) + bo_ref[...]
    o_ref[0] = out.astype(o_ref.dtype)


def self_attention(x, w_in, w_out, b_out, *, num_heads: int,
                   compute_dtype=None, q_tile=None, pad_head_dim=None,
                   vmem_limit_bytes=None):
    """x: (bs, ns, dim); w_in: (3*dim, dim); w_out: (dim, dim); b_out: (dim,)."""
    bs, ns, dim = x.shape
    assert dim % num_heads == 0
    dh = dim // num_heads
    scale = dh ** (-0.5)
    cdt = jnp.dtype(compute_dtype) if compute_dtype is not None else x.dtype

    # Pad per-head slabs to 128 lanes so head slices stay vreg-lane aligned.
    if pad_head_dim is None:
        pad_head_dim = (dh % 128 != 0)
    dhp = (-(-dh // 128)) * 128 if pad_head_dim else dh
    kdim = num_heads * dhp

    # ---- one-time host-side weight preparation --------------------------------
    w_in_t = jnp.transpose(w_in)                       # (dim, 3*dim) = [q | k | v]
    w_q_t = w_in_t[:, :dim] * scale                    # fold 1/sqrt(dh) into W_q
    w_k_t = w_in_t[:, dim:2 * dim]
    w_v_t = w_in_t[:, 2 * dim:]
    w_o_t = jnp.transpose(w_out)                       # (dim, dim)

    def pad_cols(w):   # (dim, H*dh) -> (dim, H*dhp): zero-pad per-head columns
        if dhp == dh:
            return w
        w = w.reshape(dim, num_heads, dh)
        return jnp.pad(w, ((0, 0), (0, 0), (0, dhp - dh))).reshape(dim, kdim)

    def pad_rows(w):   # (H*dh, dim) -> (H*dhp, dim): zero-pad per-head rows
        if dhp == dh:
            return w
        w = w.reshape(num_heads, dh, dim)
        return jnp.pad(w, ((0, 0), (0, dhp - dh), (0, 0))).reshape(kdim, dim)

    w_q_t = pad_cols(w_q_t).astype(cdt)                                 # (dim, kdim)
    w_kv_t = jnp.concatenate([pad_cols(w_k_t), pad_cols(w_v_t)],
                             axis=1).astype(cdt)                        # (dim, 2*kdim)
    w_o_t = pad_rows(w_o_t).astype(cdt)                                 # (kdim, dim)
    b_out2d = b_out.reshape(1, dim).astype(jnp.float32)
    x_c = x.astype(cdt)

    # ---- tiling ----------------------------------------------------------------
    # Lane-dense (tq, dim) output tiles; tq multiple of 8 (or the full ns).
    # (q_tile=256 can be worthwhile on v6e/v7x when ns % 256 == 0 and VMEM allows.)
    if q_tile is None:
        q_tile = 128 if ns % 128 == 0 else ns
    assert ns % q_tile == 0, "q_tile must divide the sequence length"
    nq = ns // q_tile

    # ---- explicit VMEM budget ---------------------------------------------------
    if vmem_limit_bytes is None:
        itc = jnp.dtype(cdt).itemsize
        ito = jnp.dtype(x.dtype).itemsize
        budget = (
            2 * ns * dim * itc                                      # x block (2 bufs)
            + 2 * (dim * kdim + dim * 2 * kdim + kdim * dim) * itc  # weights (2 bufs)
            + 2 * dim * 4                                           # bias (2 bufs)
            + ns * 2 * kdim * itc                                   # K/V scratch
            + q_tile * kdim * 4                                     # head accumulator
            + 2 * q_tile * dim * ito                                # output (2 bufs)
            + 4 * q_tile * ns * 4                                   # score temporaries
            + q_tile * (kdim + 2 * dim) * 4)                        # q + misc
        vmem_limit_bytes = min(max(int(1.5 * budget), 32 * 1024 * 1024),
                               64 * 1024 * 1024)

    kernel = functools.partial(_self_attention_kernel, num_heads=num_heads,
                               dhp=dhp, q_tile=q_tile)

    return pl.pallas_call(
        kernel,
        out_shape=jax.ShapeDtypeStruct((bs, ns, dim), x.dtype),
        grid_spec=pltpu.PrefetchScalarGridSpec(
            num_scalar_prefetch=0,
            grid=(bs, nq),
            in_specs=[
                pl.BlockSpec((1, ns, dim),     lambda b, qi: (b, 0, 0)),  # x (full seq)
                pl.BlockSpec((dim, kdim),      lambda b, qi: (0, 0)),     # W_q^T (scaled)
                pl.BlockSpec((dim, 2 * kdim),  lambda b, qi: (0, 0)),     # [W_k^T|W_v^T]
                pl.BlockSpec((kdim, dim),      lambda b, qi: (0, 0)),     # W_out^T
                pl.BlockSpec((1, dim),         lambda b, qi: (0, 0)),     # bias
            ],
            out_specs=pl.BlockSpec((1, q_tile, dim), lambda b, qi: (b, qi, 0)),
            scratch_shapes=[
                pltpu.VMEM((ns, 2 * kdim), cdt),            # per-batch K/V cache
                pltpu.VMEM((q_tile, kdim), jnp.float32),    # head output accumulator
            ],
        ),
        compiler_params=pltpu.CompilerParams(
            # Batch parallel (megacore); query-tile axis must be sequential so the
            # qi==0 K/V-scratch init is valid.
            dimension_semantics=("parallel", "arbitrary"),
            vmem_limit_bytes=vmem_limit_bytes),
    )(x_c, w_q_t, w_kv_t, w_o_t, b_out2d)


def self_attention_ref(x, w_in, w_out, b_out, *, num_heads: int):
    """Pure-JAX reference mirroring the PyTorch forward."""
    bs, ns, dim = x.shape
    dh = dim // num_heads
    scale = dh ** (-0.5)
    qkv = jnp.einsum('bnd,od->bno', x, w_in)           # proj_in (qkv_bias=False)
    qkv = qkv.reshape(bs, ns, 3, num_heads, dh).transpose(2, 0, 3, 1, 4)
    q, k, v = qkv[0], qkv[1], qkv[2]                   # (bs, H, ns, dh)
    attn = jnp.einsum('bhqd,bhkd->bhqk', q, k) * scale
    attn = jax.nn.softmax(attn, axis=-1)
    out = jnp.einsum('bhqk,bhkd->bhqd', attn, v)
    out = out.transpose(0, 2, 1, 3).reshape(bs, ns, dim)
    return jnp.einsum('bnd,od->bno', out, w_out) + b_out


if __name__ == "__main__":
    # Small, ViT-consistent shapes: batch=2, seq=8 tokens, hidden=32, heads=4.
    bs, ns, dim_hidden, num_heads = 2, 8, 32, 4

    key = jax.random.PRNGKey(0)
    kx, kw1, kw2, kb2 = jax.random.split(key, 4)

    x = jax.random.normal(kx, (bs, ns, dim_hidden), dtype=jnp.float32)
    # Deterministic "init" for the Linear layers (PyTorch [out, in] layout).
    w_in = jax.random.normal(kw1, (3 * dim_hidden, dim_hidden),
                             dtype=jnp.float32) * 0.05   # proj_in, qkv_bias=False
    w_out = jax.random.normal(kw2, (dim_hidden, dim_hidden),
                              dtype=jnp.float32) * 0.05  # proj_out weight
    b_out = jax.random.normal(kb2, (dim_hidden,), dtype=jnp.float32) * 0.05

    ref = self_attention_ref(x, w_in, w_out, b_out, num_heads=num_heads)

    # f32 compute path (tight tolerance; approx EUP reciprocal in softmax denom).
    out = jax.block_until_ready(
        self_attention(x, w_in, w_out, b_out, num_heads=num_heads))
    assert out.shape == (bs, ns, dim_hidden)
    assert jnp.allclose(out, ref, atol=2e-3, rtol=2e-3), "f32 mismatch vs reference"

    # bf16 MXU path (recommended default for v6e/v7x production shapes).
    out_bf16 = jax.block_until_ready(
        self_attention(x, w_in, w_out, b_out, num_heads=num_heads,
                       compute_dtype=jnp.bfloat16))
    assert jnp.allclose(out_bf16.astype(jnp.float32), ref,
                        atol=2e-2, rtol=2e-2), "bf16 mismatch vs reference"

    print("KERNEL_OK")
</pallas_src>

<mosaic_0001>
module attributes {stable_mosaic.version = 11 : i64} {
  func.func @_self_attention_kernel(%arg0: i32, %arg1: i32, %arg2: memref<1x8x32xf32, #tpu.memory_space<vmem>>, %arg3: memref<32x512xf32, #tpu.memory_space<vmem>>, %arg4: memref<32x1024xf32, #tpu.memory_space<vmem>>, %arg5: memref<512x32xf32, #tpu.memory_space<vmem>>, %arg6: memref<1x32xf32, #tpu.memory_space<vmem>>, %arg7: memref<1x8x32xf32, #tpu.memory_space<vmem>>, %arg8: memref<8x1024xf32, #tpu.memory_space<vmem>>, %arg9: memref<8x512xf32, #tpu.memory_space<vmem>>) attributes {dimension_semantics = [#tpu.dimension_semantics<parallel>, #tpu.dimension_semantics<arbitrary>], iteration_bounds = array<i64: 2, 1>, scalar_prefetch = 0 : i64, scratch_operands = 2 : i64, tpu.core_type = #tpu.core_type<tc>, window_params = [{transform_indices = @transform_0, window_bounds = array<i64: 1, 8, 32>}, {pipeline_mode = #tpu.pipeline_mode<synchronous>, transform_indices = @transform_1, window_bounds = array<i64: 32, 512>}, {pipeline_mode = #tpu.pipeline_mode<synchronous>, transform_indices = @transform_2, window_bounds = array<i64: 32, 1024>}, {pipeline_mode = #tpu.pipeline_mode<synchronous>, transform_indices = @transform_3, window_bounds = array<i64: 512, 32>}, {pipeline_mode = #tpu.pipeline_mode<synchronous>, transform_indices = @transform_4, window_bounds = array<i64: 1, 32>}, {transform_indices = @transform_5, window_bounds = array<i64: 1, 8, 32>}]} {
    %c0_i32 = arith.constant 0 : i32
    %0 = arith.cmpi eq, %arg1, %c0_i32 : i32
    %1 = arith.extui %0 : i1 to i32
    %c0_i32_0 = arith.constant 0 : i32
    %2 = arith.cmpi ne, %1, %c0_i32_0 : i32
    scf.if %2 {
      %c0_47 = arith.constant 0 : index
      %c0_48 = arith.constant 0 : index
      %c0_49 = arith.constant 0 : index
      %83 = vector.load %arg2[%c0_47, %c0_48, %c0_49] : memref<1x8x32xf32, #tpu.memory_space<vmem>>, vector<1x8x32xf32>
      %84 = vector.shape_cast %83 : vector<1x8x32xf32> to vector<8x32xf32>
      %c0_50 = arith.constant 0 : index
      %c0_51 = arith.constant 0 : index
      %85 = vector.load %arg4[%c0_50, %c0_51] : memref<32x1024xf32, #tpu.memory_space<vmem>>, vector<32x1024xf32>
      %cst_52 = arith.constant dense<0.000000e+00> : vector<8x1024xf32>
      %86 = tpu.matmul %84, %85, %cst_52 {dimension_numbers = #tpu.dot_dimension_numbers<[1], [0], [0], [1], [0, 0, 1, 1], [], []>} : vector<8x32xf32>, vector<32x1024xf32>, vector<8x1024xf32> -> vector<8x1024xf32>
      %c0_53 = arith.constant 0 : index
      %c0_54 = arith.constant 0 : index
      %87 = vector.load %arg8[%c0_53, %c0_54] : memref<8x1024xf32, #tpu.memory_space<vmem>>, vector<8x1024xf32>
      tpu.vector_store %arg8[%c0_53, %c0_54], %86 {strides = array<i32>} : memref<8x1024xf32, #tpu.memory_space<vmem>>, vector<8x1024xf32>,
    } else {
    }
    %c8_i32 = arith.constant 8 : i32
    %3 = arith.muli %arg1, %c8_i32 : i32
    %4 = tpu.assume_multiple %3, 8 : i32
    %c0 = arith.constant 0 : index
    %5 = arith.index_cast %4 : i32 to index
    %c0_1 = arith.constant 0 : index
    %6 = vector.load %arg2[%c0, %5, %c0_1] : memref<1x8x32xf32, #tpu.memory_space<vmem>>, vector<1x8x32xf32>
    %7 = vector.shape_cast %6 : vector<1x8x32xf32> to vector<8x32xf32>
    %c0_2 = arith.constant 0 : index
    %c0_3 = arith.constant 0 : index
    %8 = vector.load %arg3[%c0_2, %c0_3] : memref<32x512xf32, #tpu.memory_space<vmem>>, vector<32x512xf32>
    %cst = arith.constant dense<0.000000e+00> : vector<8x512xf32>
    %9 = tpu.matmul %7, %8, %cst {dimension_numbers = #tpu.dot_dimension_numbers<[1], [0], [0], [1], [0, 0, 1, 1], [], []>} : vector<8x32xf32>, vector<32x512xf32>, vector<8x512xf32> -> vector<8x512xf32>
    %10 = vector.extract_strided_slice %9 {offsets = [0, 0], sizes = [8, 128], strides = [1, 1]} : vector<8x512xf32> to vector<8x128xf32>
    %c0_4 = arith.constant 0 : index
    %c0_5 = arith.constant 0 : index
    %11 = vector.load %arg8[%c0_4, %c0_5] : memref<8x1024xf32, #tpu.memory_space<vmem>>, vector<8x128xf32>
    %c0_6 = arith.constant 0 : index
    %c512 = arith.constant 512 : index
    %12 = vector.load %arg8[%c0_6, %c512] : memref<8x1024xf32, #tpu.memory_space<vmem>>, vector<8x128xf32>
    %cst_7 = arith.constant dense<0.000000e+00> : vector<8x8xf32>
    %13 = tpu.matmul %10, %11, %cst_7 {dimension_numbers = #tpu.dot_dimension_numbers<[1], [1], [0], [0], [0, 0, 1, 0], [], []>} : vector<8x128xf32>, vector<8x128xf32>, vector<8x8xf32> -> vector<8x8xf32>
    %cst_8 = arith.constant dense<0xFF800000> : vector<8xf32>
    %14 = vector.multi_reduction <maximumf>, %13, %cst_8 [1] : vector<8x8xf32> to vector<8xf32>
    %15 = vector.shape_cast %14 : vector<8xf32> to vector<8x1xf32>
    %16 = vector.broadcast %15 : vector<8x1xf32> to vector<8x8xf32>
    %17 = arith.subf %13, %16 : vector<8x8xf32>
    %18 = math.exp %17 : vector<8x8xf32>
    %cst_9 = arith.constant dense<0.000000e+00> : vector<8x128xf32>
    %19 = tpu.matmul %18, %12, %cst_9 {dimension_numbers = #tpu.dot_dimension_numbers<[1], [0], [0], [1], [0, 0, 1, 1], [], []>} : vector<8x8xf32>, vector<8x128xf32>, vector<8x128xf32> -> vector<8x128xf32>
    %cst_10 = arith.constant dense<0.000000e+00> : vector<8xf32>
    %20 = vector.multi_reduction <add>, %18, %cst_10 [1] : vector<8x8xf32> to vector<8xf32>
    %21 = vector.shape_cast %20 : vector<8xf32> to vector<8x1xf32>
    %22 = tpu.reciprocal %21 {approx = true} : vector<8x1xf32> -> vector<8x1xf32>
    %23 = vector.broadcast %22 : vector<8x1xf32> to vector<8x128xf32>
    %24 = arith.mulf %19, %23 : vector<8x128xf32>
    %c0_11 = arith.constant 0 : index
    %c0_12 = arith.constant 0 : index
    %25 = vector.load %arg9[%c0_11, %c0_12] : memref<8x512xf32, #tpu.memory_space<vmem>>, vector<8x128xf32>
    tpu.vector_store %arg9[%c0_11, %c0_12], %24 {strides = array<i32>} : memref<8x512xf32, #tpu.memory_space<vmem>>, vector<8x128xf32>,
    %26 = vector.extract_strided_slice %9 {offsets = [0, 128], sizes = [8, 128], strides = [1, 1]} : vector<8x512xf32> to vector<8x128xf32>
    %c0_13 = arith.constant 0 : index
    %c128 = arith.constant 128 : index
    %27 = vector.load %arg8[%c0_13, %c128] : memref<8x1024xf32, #tpu.memory_space<vmem>>, vector<8x128xf32>
    %c0_14 = arith.constant 0 : index
    %c640 = arith.constant 640 : index
    %28 = vector.load %arg8[%c0_14, %c640] : memref<8x1024xf32, #tpu.memory_space<vmem>>, vector<8x128xf32>
    %cst_15 = arith.constant dense<0.000000e+00> : vector<8x8xf32>
    %29 = tpu.matmul %26, %27, %cst_15 {dimension_numbers = #tpu.dot_dimension_numbers<[1], [1], [0], [0], [0, 0, 1, 0], [], []>} : vector<8x128xf32>, vector<8x128xf32>, vector<8x8xf32> -> vector<8x8xf32>
    %cst_16 = arith.constant dense<0xFF800000> : vector<8xf32>
    %30 = vector.multi_reduction <maximumf>, %29, %cst_16 [1] : vector<8x8xf32> to vector<8xf32>
    %31 = vector.shape_cast %30 : vector<8xf32> to vector<8x1xf32>
    %32 = vector.broadcast %31 : vector<8x1xf32> to vector<8x8xf32>
    %33 = arith.subf %29, %32 : vector<8x8xf32>
    %34 = math.exp %33 : vector<8x8xf32>
    %cst_17 = arith.constant dense<0.000000e+00> : vector<8x128xf32>
    %35 = tpu.matmul %34, %28, %cst_17 {dimension_numbers = #tpu.dot_dimension_numbers<[1], [0], [0], [1], [0, 0, 1, 1], [], []>} : vector<8x8xf32>, vector<8x128xf32>, vector<8x128xf32> -> vector<8x128xf32>
    %cst_18 = arith.constant dense<0.000000e+00> : vector<8xf32>
    %36 = vector.multi_reduction <add>, %34, %cst_18 [1] : vector<8x8xf32> to vector<8xf32>
    %37 = vector.shape_cast %36 : vector<8xf32> to vector<8x1xf32>
    %38 = tpu.reciprocal %37 {approx = true} : vector<8x1xf32> -> vector<8x1xf32>
    %39 = vector.broadcast %38 : vector<8x1xf32> to vector<8x128xf32>
    %40 = arith.mulf %35, %39 : vector<8x128xf32>
    %c0_19 = arith.constant 0 : index
    %c128_20 = arith.constant 128 : index
    %41 = vector.load %arg9[%c0_19, %c128_20] : memref<8x512xf32, #tpu.memory_space<vmem>>, vector<8x128xf32>
    tpu.vector_store %arg9[%c0_19, %c128_20], %40 {strides = array<i32>} : memref<8x512xf32, #tpu.memory_space<vmem>>, vector<8x128xf32>,
    %42 = vector.extract_strided_slice %9 {offsets = [0, 256], sizes = [8, 128], strides = [1, 1]} : vector<8x512xf32> to vector<8x128xf32>
    %c0_21 = arith.constant 0 : index
    %c256 = arith.constant 256 : index
    %43 = vector.load %arg8[%c0_21, %c256] : memref<8x1024xf32, #tpu.memory_space<vmem>>, vector<8x128xf32>
    %c0_22 = arith.constant 0 : index
    %c768 = arith.constant 768 : index
    %44 = vector.load %arg8[%c0_22, %c768] : memref<8x1024xf32, #tpu.memory_space<vmem>>, vector<8x128xf32>
    %cst_23 = arith.constant dense<0.000000e+00> : vector<8x8xf32>
    %45 = tpu.matmul %42, %43, %cst_23 {dimension_numbers = #tpu.dot_dimension_numbers<[1], [1], [0], [0], [0, 0, 1, 0], [], []>} : vector<8x128xf32>, vector<8x128xf32>, vector<8x8xf32> -> vector<8x8xf32>
    %cst_24 = arith.constant dense<0xFF800000> : vector<8xf32>
    %46 = vector.multi_reduction <maximumf>, %45, %cst_24 [1] : vector<8x8xf32> to vector<8xf32>
    %47 = vector.shape_cast %46 : vector<8xf32> to vector<8x1xf32>
    %48 = vector.broadcast %47 : vector<8x1xf32> to vector<8x8xf32>
    %49 = arith.subf %45, %48 : vector<8x8xf32>
    %50 = math.exp %49 : vector<8x8xf32>
    %cst_25 = arith.constant dense<0.000000e+00> : vector<8x128xf32>
    %51 = tpu.matmul %50, %44, %cst_25 {dimension_numbers = #tpu.dot_dimension_numbers<[1], [0], [0], [1], [0, 0, 1, 1], [], []>} : vector<8x8xf32>, vector<8x128xf32>, vector<8x128xf32> -> vector<8x128xf32>
    %cst_26 = arith.constant dense<0.000000e+00> : vector<8xf32>
    %52 = vector.multi_reduction <add>, %50, %cst_26 [1] : vector<8x8xf32> to vector<8xf32>
    %53 = vector.shape_cast %52 : vector<8xf32> to vector<8x1xf32>
    %54 = tpu.reciprocal %53 {approx = true} : vector<8x1xf32> -> vector<8x1xf32>
    %55 = vector.broadcast %54 : vector<8x1xf32> to vector<8x128xf32>
    %56 = arith.mulf %51, %55 : vector<8x128xf32>
    %c0_27 = arith.constant 0 : index
    %c256_28 = arith.constant 256 : index
    %57 = vector.load %arg9[%c0_27, %c256_28] : memref<8x512xf32, #tpu.memory_space<vmem>>, vector<8x128xf32>
    tpu.vector_store %arg9[%c0_27, %c256_28], %56 {strides = array<i32>} : memref<8x512xf32, #tpu.memory_space<vmem>>, vector<8x128xf32>,
    %58 = vector.extract_strided_slice %9 {offsets = [0, 384], sizes = [8, 128], strides = [1, 1]} : vector<8x512xf32> to vector<8x128xf32>
    %c0_29 = arith.constant 0 : index
    %c384 = arith.constant 384 : index
    %59 = vector.load %arg8[%c0_29, %c384] : memref<8x1024xf32, #tpu.memory_space<vmem>>, vector<8x128xf32>
    %c0_30 = arith.constant 0 : index
    %c896 = arith.constant 896 : index
    %60 = vector.load %arg8[%c0_30, %c896] : memref<8x1024xf32, #tpu.memory_space<vmem>>, vector<8x128xf32>
    %cst_31 = arith.constant dense<0.000000e+00> : vector<8x8xf32>
    %61 = tpu.matmul %58, %59, %cst_31 {dimension_numbers = #tpu.dot_dimension_numbers<[1], [1], [0], [0], [0, 0, 1, 0], [], []>} : vector<8x128xf32>, vector<8x128xf32>, vector<8x8xf32> -> vector<8x8xf32>
    %cst_32 = arith.constant dense<0xFF800000> : vector<8xf32>
    %62 = vector.multi_reduction <maximumf>, %61, %cst_32 [1] : vector<8x8xf32> to vector<8xf32>
    %63 = vector.shape_cast %62 : vector<8xf32> to vector<8x1xf32>
    %64 = vector.broadcast %63 : vector<8x1xf32> to vector<8x8xf32>
    %65 = arith.subf %61, %64 : vector<8x8xf32>
    %66 = math.exp %65 : vector<8x8xf32>
    %cst_33 = arith.constant dense<0.000000e+00> : vector<8x128xf32>
    %67 = tpu.matmul %66, %60, %cst_33 {dimension_numbers = #tpu.dot_dimension_numbers<[1], [0], [0], [1], [0, 0, 1, 1], [], []>} : vector<8x8xf32>, vector<8x128xf32>, vector<8x128xf32> -> vector<8x128xf32>
    %cst_34 = arith.constant dense<0.000000e+00> : vector<8xf32>
    %68 = vector.multi_reduction <add>, %66, %cst_34 [1] : vector<8x8xf32> to vector<8xf32>
    %69 = vector.shape_cast %68 : vector<8xf32> to vector<8x1xf32>
    %70 = tpu.reciprocal %69 {approx = true} : vector<8x1xf32> -> vector<8x1xf32>
    %71 = vector.broadcast %70 : vector<8x1xf32> to vector<8x128xf32>
    %72 = arith.mulf %67, %71 : vector<8x128xf32>
    %c0_35 = arith.constant 0 : index
    %c384_36 = arith.constant 384 : index
    %73 = vector.load %arg9[%c0_35, %c384_36] : memref<8x512xf32, #tpu.memory_space<vmem>>, vector<8x128xf32>
    tpu.vector_store %arg9[%c0_35, %c384_36], %72 {strides = array<i32>} : memref<8x512xf32, #tpu.memory_space<vmem>>, vector<8x128xf32>,
    %c0_37 = arith.constant 0 : index
    %c0_38 = arith.constant 0 : index
    %74 = vector.load %arg9[%c0_37, %c0_38] : memref<8x512xf32, #tpu.memory_space<vmem>>, vector<8x512xf32>
    %c0_39 = arith.constant 0 : index
    %c0_40 = arith.constant 0 : index
    %75 = vector.load %arg5[%c0_39, %c0_40] : memref<512x32xf32, #tpu.memory_space<vmem>>, vector<512x32xf32>
    %cst_41 = arith.constant dense<0.000000e+00> : vector<8x32xf32>
    %76 = tpu.matmul %74, %75, %cst_41 {dimension_numbers = #tpu.dot_dimension_numbers<[1], [0], [0], [1], [0, 0, 1, 1], [], []>} : vector<8x512xf32>, vector<512x32xf32>, vector<8x32xf32> -> vector<8x32xf32>
    %c0_42 = arith.constant 0 : index
    %c0_43 = arith.constant 0 : index
    %77 = vector.load %arg6[%c0_42, %c0_43] : memref<1x32xf32, #tpu.memory_space<vmem>>, vector<1x32xf32>
    %78 = vector.broadcast %77 : vector<1x32xf32> to vector<8x32xf32>
    %79 = arith.addf %76, %78 : vector<8x32xf32>
    %c0_44 = arith.constant 0 : index
    %c0_45 = arith.constant 0 : index
    %c0_46 = arith.constant 0 : index
    %80 = vector.load %arg7[%c0_44, %c0_45, %c0_46] : memref<1x8x32xf32, #tpu.memory_space<vmem>>, vector<1x8x32xf32>
    %81 = vector.shape_cast %80 : vector<1x8x32xf32> to vector<8x32xf32>
    %82 = vector.shape_cast %79 : vector<8x32xf32> to vector<1x8x32xf32>
    tpu.vector_store %arg7[%c0_44, %c0_45, %c0_46], %82 {strides = array<i32>} : memref<1x8x32xf32, #tpu.memory_space<vmem>>, vector<1x8x32xf32>,
    return
  }
  func.func @transform_0(%arg0: i32, %arg1: i32) -> (i32, i32, i32) {
    %c0_i32 = arith.constant 0 : i32
    %c0_i32_0 = arith.constant 0 : i32
    %c0_i32_1 = arith.constant 0 : i32
    return %arg0, %c0_i32, %c0_i32_0 : i32, i32, i32
  }
  func.func @transform_1(%arg0: i32, %arg1: i32) -> (i32, i32) {
    %c0_i32 = arith.constant 0 : i32
    %c0_i32_0 = arith.constant 0 : i32
    %c0_i32_1 = arith.constant 0 : i32
    return %c0_i32, %c0_i32_0 : i32, i32
  }
  func.func @transform_2(%arg0: i32, %arg1: i32) -> (i32, i32) {
    %c0_i32 = arith.constant 0 : i32
    %c0_i32_0 = arith.constant 0 : i32
    %c0_i32_1 = arith.constant 0 : i32
    return %c0_i32, %c0_i32_0 : i32, i32
  }
  func.func @transform_3(%arg0: i32, %arg1: i32) -> (i32, i32) {
    %c0_i32 = arith.constant 0 : i32
    %c0_i32_0 = arith.constant 0 : i32
    %c0_i32_1 = arith.constant 0 : i32
    return %c0_i32, %c0_i32_0 : i32, i32
  }
  func.func @transform_4(%arg0: i32, %arg1: i32) -> (i32, i32) {
    %c0_i32 = arith.constant 0 : i32
    %c0_i32_0 = arith.constant 0 : i32
    %c0_i32_1 = arith.constant 0 : i32
    return %c0_i32, %c0_i32_0 : i32, i32
  }
  func.func @transform_5(%arg0: i32, %arg1: i32) -> (i32, i32, i32) {
    %c0_i32 = arith.constant 0 : i32
    %c0_i32_0 = arith.constant 0 : i32
    return %arg0, %arg1, %c0_i32 : i32, i32, i32
  }
}

</mosaic_0001>

<llo_original>
// kernel: tpu_custom_call.1
$region0: #{tpu_custom_call.1}
  #allocation0 [shape = 'u32[]', space=smem, size = 0x4, offset = 0x4, fixed_abs, tag = 'smem constant byte address 0x4 - core index']
  #allocation1 [shape = 'u32[144,128]{1,0:T(1,128)}', space=vmem, size = 0x12000, scoped, tag = 'internal scratch']
  #allocation2 [shape = 'f32[8,1024]{1,0:T(8,128)}', space=vmem, size = 0x8000, scoped, tag = 'scratch operand']
  #allocation3 [shape = 'f32[8,512]{1,0:T(8,128)}', space=vmem, size = 0x4000, scoped, tag = 'scratch operand']
  %s0 = inlined_call_operand.vmem [shape: f32[2,8,32], index: 0, kind: input, shape index: {}]
  %s1 = inlined_call_operand.vmem [shape: f32[32,512], index: 1, kind: input, shape index: {}]
  %s2 = inlined_call_operand.vmem [shape: f32[32,1024], index: 2, kind: input, shape index: {}]
  %s3 = inlined_call_operand.vmem [shape: f32[512,32], index: 3, kind: input, shape index: {}]
  %s4 = inlined_call_operand.vmem [shape: f32[1,32], index: 4, kind: input, shape index: {}]
  %s5 = inlined_call_operand.hbm [shape: f32[2,8,32], index: 5, kind: output, shape index: {}]
  %s6 = sld [smem:[#allocation0]]
  $region57: #{tpu_custom_call.1} parent=0
    _
  %s8 = ssub.s32 1, %s6
  %s9 = scalar_select 0, %s8, %s6
  $region1: #{tpu_custom_call.1} parent=0
    #allocation4 [shape = 'u8[8192]{0}', space=vmem, size = 0x2000, scoped, tag = 'output window, operand 0']
    #allocation5 [shape = 's32[2]{0}', space=sflag, size = 0x8, scoped, tag = 'scoped memory for tpu_custom_call.1']
    %10 = vsyncpa [#allocation5], 0
    %s11 = scalar_lea.sflag [#allocation5], 1
    %12 = vsyncpa %s11, 0
    loop: start=0, step=1, limit=4
    $region2: #{tpu_custom_call.1} parent=1 // loop_pre_header
      _
    $region3: #{tpu_custom_call.1} parent=1 // loop_header
      %s14 = sphi 0, %s18
      %p15 = scmp.ge.s32.totalorder %s14, 4
      %s21 = sphi 0, %s33
      %s22 = sphi 0, %s29
      %s23 = sphi 0, %s21
      %s24 = sphi 0, %s22
      %s25 = sphi 0, %s23
      %s26 = sphi 0, %s24
      %s36 = sphi 0, %s38
      %s39 = sphi 0, %s36
      %s40 = sphi 0, %s39
      %s56 = sphi 0, %s40
      %s60 = sphi 0, %s60
      %s62 = sphi 0, %s60
      %s63 = sphi 0, %s62
      %s77 = sphi 0, %s63
      %s81 = sphi 0, %s81
      %s83 = sphi 0, %s81
      %s84 = sphi 0, %s83
      %s98 = sphi 0, %s84
      %s102 = sphi 0, %s102
      %s104 = sphi 0, %s102
      %s105 = sphi 0, %s104
      %s119 = sphi 0, %s105
      %s123 = sphi 0, %s123
      %s125 = sphi 0, %s123
      %s126 = sphi 0, %s125
      %s140 = sphi 0, %s126
      %s148 = sphi 0, %s150
      %s151 = sphi 0, %s148
      %s152 = sphi 0, %s151
      %s168 = sphi 0, %s152
    $region4: #{tpu_custom_call.1} parent=1 // loop_header_branch
      %17 = sbr.rel (%p15) target = $region8
    $region5: #{tpu_custom_call.1} parent=1 // loop_body
      %s19 = ssub.s32 %s14, 1
      %s20 = ssub.s32 %s14, 2
      %s27 = sadd.s32 1, %s22
      %p28 = scmp.ge.s32.totalorder %s27, 1
      %s29 = scalar_select %p28, 0, %s27
      %s30 = sadd.s32 1, %s21
      %s31 = scalar_select %p28, %s30, %s21
      %p32 = scmp.ge.s32.totalorder %s31, 2
      %s33 = scalar_select %p32, 0, %s31
      %s34 = ssub.s32 %s21, %s33
      %p35 = scmp.eq.s32.totalorder %s34, 0
      %s37 = sadd.s32 %s36, 1
      %s38 = scalar_select %p35, %s36, %s37
      %p41 = pneg %p35
      %p42 = scmp.eq.s32.totalorder %s14, 1
      %p43 = por %p41, %p42
      %p44 = scmp.ne.s32.totalorder %s36, %s39
      %p45 = scmp.eq.s32.totalorder %s14, 0
      %p46 = por %p44, %p45
      %p47 = scmp.ne.s32.totalorder %s36, %s39
      %p48 = scmp.eq.s32.totalorder %s19, 1
      %p49 = por %p47, %p48
      %p50 = scmp.ne.s32.totalorder %s39, %s40
      %p51 = scmp.eq.s32.totalorder %s19, 0
      %p52 = por %p50, %p51
      %p53 = scmp.ne.s32.totalorder %s39, %s40
      %p54 = scmp.eq.s32.totalorder %s20, 1
      %p55 = por %p53, %p54
      %p57 = scmp.ne.s32.totalorder %s40, %s56
      %p58 = scmp.eq.s32.totalorder %s20, 0
      %p59 = por %p57, %p58
      %s61 = sadd.s32 %s60, 1
      %p64 = scmp.eq.s32.totalorder %s14, 1
      %p65 = scmp.ne.s32.totalorder %s60, %s62
      %p66 = scmp.eq.s32.totalorder %s14, 0
      %p67 = por %p65, %p66
      %p68 = scmp.ne.s32.totalorder %s60, %s62
      %p69 = scmp.eq.s32.totalorder %s19, 1
      %p70 = por %p68, %p69
      %p71 = scmp.ne.s32.totalorder %s62, %s63
      %p72 = scmp.eq.s32.totalorder %s19, 0
      %p73 = por %p71, %p72
      %p74 = scmp.ne.s32.totalorder %s62, %s63
      %p75 = scmp.eq.s32.totalorder %s20, 1
      %p76 = por %p74, %p75
      %p78 = scmp.ne.s32.totalorder %s63, %s77
      %p79 = scmp.eq.s32.totalorder %s20, 0
      %p80 = por %p78, %p79
      %s82 = sadd.s32 %s81, 1
      %p85 = scmp.eq.s32.totalorder %s14, 1
      %p86 = scmp.ne.s32.totalorder %s81, %s83
      %p87 = scmp.eq.s32.totalorder %s14, 0
      %p88 = por %p86, %p87
      %p89 = scmp.ne.s32.totalorder %s81, %s83
      %p90 = scmp.eq.s32.totalorder %s19, 1
      %p91 = por %p89, %p90
      %p92 = scmp.ne.s32.totalorder %s83, %s84
      %p93 = scmp.eq.s32.totalorder %s19, 0
      %p94 = por %p92, %p93
      %p95 = scmp.ne.s32.totalorder %s83, %s84
      %p96 = scmp.eq.s32.totalorder %s20, 1
      %p97 = por %p95, %p96
      %p99 = scmp.ne.s32.totalorder %s84, %s98
      %p100 = scmp.eq.s32.totalorder %s20, 0
      %p101 = por %p99, %p100
      %s103 = sadd.s32 %s102, 1
      %p106 = scmp.eq.s32.totalorder %s14, 1
      %p107 = scmp.ne.s32.totalorder %s102, %s104
      %p108 = scmp.eq.s32.totalorder %s14, 0
      %p109 = por %p107, %p108
      %p110 = scmp.ne.s32.totalorder %s102, %s104
      %p111 = scmp.eq.s32.totalorder %s19, 1
      %p112 = por %p110, %p111
      %p113 = scmp.ne.s32.totalorder %s104, %s105
      %p114 = scmp.eq.s32.totalorder %s19, 0
      %p115 = por %p113, %p114
      %p116 = scmp.ne.s32.totalorder %s104, %s105
      %p117 = scmp.eq.s32.totalorder %s20, 1
      %p118 = por %p116, %p117
      %p120 = scmp.ne.s32.totalorder %s105, %s119
      %p121 = scmp.eq.s32.totalorder %s20, 0
      %p122 = por %p120, %p121
      %s124 = sadd.s32 %s123, 1
      %p127 = scmp.eq.s32.totalorder %s14, 1
      %p128 = scmp.ne.s32.totalorder %s123, %s125
      %p129 = scmp.eq.s32.totalorder %s14, 0
      %p130 = por %p128, %p129
      %p131 = scmp.ne.s32.totalorder %s123, %s125
      %p132 = scmp.eq.s32.totalorder %s19, 1
      %p133 = por %p131, %p132
      %p134 = scmp.ne.s32.totalorder %s125, %s126
      %p135 = scmp.eq.s32.totalorder %s19, 0
      %p136 = por %p134, %p135
      %p137 = scmp.ne.s32.totalorder %s125, %s126
      %p138 = scmp.eq.s32.totalorder %s20, 1
      %p139 = por %p137, %p138
      %p141 = scmp.ne.s32.totalorder %s126, %s140
      %p142 = scmp.eq.s32.totalorder %s20, 0
      %p143 = por %p141, %p142
      %s144 = ssub.s32 %s21, %s33
      %s145 = ssub.s32 %s22, %s29
      %s146 = sor.u32 %s144, %s145
      %p147 = scmp.eq.s32.totalorder %s146, 0
      %s149 = sadd.s32 %s148, 1
      %s150 = scalar_select %p147, %s148, %s149
      %p153 = pneg %p147
      %p154 = scmp.eq.s32.totalorder %s14, 1
      %p155 = por %p153, %p154
      %p156 = scmp.ne.s32.totalorder %s148, %s151
      %p157 = scmp.eq.s32.totalorder %s14, 0
      %p158 = por %p156, %p157
      %p159 = scmp.ne.s32.totalorder %s148, %s151
      %p160 = scmp.eq.s32.totalorder %s19, 1
      %p161 = por %p159, %p160
      %p162 = scmp.ne.s32.totalorder %s151, %s152
      %p163 = scmp.eq.s32.totalorder %s19, 0
      %p164 = por %p162, %p163
      %p165 = scmp.ne.s32.totalorder %s151, %s152
      %p166 = scmp.eq.s32.totalorder %s20, 1
      %p167 = por %p165, %p166
      %p169 = scmp.ne.s32.totalorder %s152, %s168
      %p170 = scmp.eq.s32.totalorder %s20, 0
      %p171 = por %p169, %p170
      %p172 = scmp.le.s32.totalorder 1, %s14
      %p173 = scmp.lt.s32.totalorder %s14, 3
      %p174 = pnand %p172, %p173
      %p175 = pneg %p174
      // Predicated region
      $region9: #{tpu_custom_call.1} parent=5 // pred_check
        _
      $region10: #{tpu_custom_call.1} parent=5 // pred_check_branch
        %177 = sbr.rel (%p174) target = $region12
      $region11: #{tpu_custom_call.1} parent=5 // pred_region
        %s178 = ssub.s32 %s14, 1
        // Predicated region
        $region13: #{tpu_custom_call.1} parent=11 // pred_check
          %p179 = pneg %p73
        $region14: #{tpu_custom_call.1} parent=11 // pred_check_branch
          %181 = sbr.rel (%p179) target = $region16
        $region15: #{tpu_custom_call.1} parent=11 // pred_region
          _
        $region16: #{tpu_custom_call.1} parent=11 // pred_fallthru
          _
        // Predicated region
        $region17: #{tpu_custom_call.1} parent=11 // pred_check
          %p182 = pneg %p94
        $region18: #{tpu_custom_call.1} parent=11 // pred_check_branch
          %184 = sbr.rel (%p182) target = $region20
        $region19: #{tpu_custom_call.1} parent=11 // pred_region
          _
        $region20: #{tpu_custom_call.1} parent=11 // pred_fallthru
          _
        // Predicated region
        $region21: #{tpu_custom_call.1} parent=11 // pred_check
          %p185 = pneg %p115
        $region22: #{tpu_custom_call.1} parent=11 // pred_check_branch
          %187 = sbr.rel (%p185) target = $region24
        $region23: #{tpu_custom_call.1} parent=11 // pred_region
          _
        $region24: #{tpu_custom_call.1} parent=11 // pred_fallthru
          _
        // Predicated region
        $region25: #{tpu_custom_call.1} parent=11 // pred_check
          %p188 = pneg %p136
        $region26: #{tpu_custom_call.1} parent=11 // pred_check_branch
          %190 = sbr.rel (%p188) target = $region28
        $region27: #{tpu_custom_call.1} parent=11 // pred_region
          _
        $region28: #{tpu_custom_call.1} parent=11 // pred_fallthru
          _
      $region12: #{tpu_custom_call.1} parent=5 // pred_fallthru
        _
      %p191 = scmp.lt.s32.totalorder %s14, 2
      // Predicated region
      $region29: #{tpu_custom_call.1} parent=5 // pred_check
        %p192 = pneg %p191
      $region30: #{tpu_custom_call.1} parent=5 // pred_check_branch
        %194 = sbr.rel (%p192) target = $region32
      $region31: #{tpu_custom_call.1} parent=5 // pred_region
        // Predicated region
        $region33: #{tpu_custom_call.1} parent=31 // pred_check
          %p195 = pneg %p46
        $region34: #{tpu_custom_call.1} parent=31 // pred_check_branch
          %197 = sbr.rel (%p195) target = $region36
        $region35: #{tpu_custom_call.1} parent=31 // pred_region
          %p198 = scmp.lt.s32.totalorder %s21, 1
          %s199 = scalar_select %p198, %s21, 1
          %s200 = smul.addr %s199, 8
          %s201 = scalar_lea.vmem %s0, %s200
        $region36: #{tpu_custom_call.1} parent=31 // pred_fallthru
          _
      $region32: #{tpu_custom_call.1} parent=5 // pred_fallthru
        _
      %p202 = scmp.le.s32.totalorder 1, %s14
      %p203 = scmp.lt.s32.totalorder %s14, 3
      %p204 = pnand %p202, %p203
      %p205 = pneg %p204
      // Predicated region
      $region37: #{tpu_custom_call.1} parent=5 // pred_check
        _
      $region38: #{tpu_custom_call.1} parent=5 // pred_check_branch
        %207 = sbr.rel (%p204) target = $region40
      $region39: #{tpu_custom_call.1} parent=5 // pred_region
        %s208 = ssub.s32 %s14, 1
        %p209 = scmp.lt.s32.totalorder %s23, 1
        %s210 = scalar_select %p209, %s23, 1
        %s211 = smul.addr %s210, 8
        %s212 = scalar_lea.vmem %s0, %s211
        %p213 = pneg %p52
        %p214 = pneg %p49
        %p215 = pneg %p73
        %p216 = pneg %p70
        %p217 = pneg %p94
        %p218 = pneg %p91
        %p219 = pneg %p115
        %p220 = pneg %p112
        %p221 = pneg %p136
        %p222 = pneg %p133
        %p223 = pneg %p164
        %p224 = pneg %p161
        %s225 = sand.u32 %s151, 1
        %s226 = scalar_lea.sflag [#allocation5], %s225
        %s227 = sand.u32 %s151, 1
        %s228 = smul.addr %s227, 8
        %s229 = scalar_lea.vmem [#allocation4], %s228
        %p230 = scmp.lt.s32.totalorder %s23, 1
        %s231 = scalar_select %p230, %s23, 1
        %s232 = smul.addr %s231, 8
        %s233 = scalar_lea.vmem %s0, %s232
        %p234 = scmp.eq.s32.totalorder %s24, 0
        // Predicated region
        $region41: #{tpu_custom_call.1} parent=39 // pred_check
          %p235 = pneg %p234
        $region42: #{tpu_custom_call.1} parent=39 // pred_check_branch
          %237 = sbr.rel (%p235) target = $region44
        $region43: #{tpu_custom_call.1} parent=39 // pred_region
          %v238 = vld [vmem:[%s233] sm:$0xff]
          %v239 = vld [vmem:[%s2] sm:$0xff]
          %v240 = vld [vmem:[%s2 + $0x8] sm:$0xff]
          %v241 = vld [vmem:[%s2 + $0x10] sm:$0xff]
          %v242 = vld [vmem:[%s2 + $0x18] sm:$0xff]
          %v243 = vld [vmem:[%s2 + $0x20] sm:$0xff]
          %v244 = vld [vmem:[%s2 + $0x28] sm:$0xff]
          %v245 = vld [vmem:[%s2 + $0x30] sm:$0xff]
          %v246 = vld [vmem:[%s2 + $0x38] sm:$0xff]
          %v247 = vld [vmem:[%s2 + $0x40] sm:$0xff]
          %v248 = vld [vmem:[%s2 + $0x48] sm:$0xff]
          %v249 = vld [vmem:[%s2 + $0x50] sm:$0xff]
          %v250 = vld [vmem:[%s2 + $0x58] sm:$0xff]
          %v251 = vld [vmem:[%s2 + $0x60] sm:$0xff]
          %v252 = vld [vmem:[%s2 + $0x68] sm:$0xff]
          %v253 = vld [vmem:[%s2 + $0x70] sm:$0xff]
          %v254 = vld [vmem:[%s2 + $0x78] sm:$0xff]
          %v255 = vld [vmem:[%s2 + $0x80] sm:$0xff]
          %v256 = vld [vmem:[%s2 + $0x88] sm:$0xff]
          %v257 = vld [vmem:[%s2 + $0x90] sm:$0xff]
          %v258 = vld [vmem:[%s2 + $0x98] sm:$0xff]
          %v259 = vld [vmem:[%s2 + $0xa0] sm:$0xff]
          %v260 = vld [vmem:[%s2 + $0xa8] sm:$0xff]
          %v261 = vld [vmem:[%s2 + $0xb0] sm:$0xff]
          %v262 = vld [vmem:[%s2 + $0xb8] sm:$0xff]
          %v263 = vld [vmem:[%s2 + $0xc0] sm:$0xff]
          %v264 = vld [vmem:[%s2 + $0xc8] sm:$0xff]
          %v265 = vld [vmem:[%s2 + $0xd0] sm:$0xff]
          %v266 = vld [vmem:[%s2 + $0xd8] sm:$0xff]
          %v267 = vld [vmem:[%s2 + $0xe0] sm:$0xff]
          %v268 = vld [vmem:[%s2 + $0xe8] sm:$0xff]
          %v269 = vld [vmem:[%s2 + $0xf0] sm:$0xff]
          %v270 = vld [vmem:[%s2 + $0xf8] sm:$0xff]
          %vm271 = vcmask 261120
          %v273 = vsel %vm271, %v238, 0
          %275 = vmatprep.subr.mxu0 %v240
          %276 = vmatpush1.msra.mxu0 %v239
          %277 = vmatprep.subr.mxu0 %v248
          %278 = vmatpush1.msra.mxu0 %v247
          %279 = vmatprep.subr.mxu0 %v256
          %280 = vmatpush1.msra.mxu0 %v255
          %281 = vmatprep.subr.mxu0 %v264
          %282 = vmatpush1.msra.mxu0 %v263
          %283 = vmatprep.subr.mxu0 0.0
          %284 = vmatpush1.msra.mxu0 0.0
          %285 = vmatprep.subr.mxu0 0.0
          %286 = vmatpush1.msra.mxu0 0.0
          %287 = vmatprep.subr.mxu0 0.0
          %288 = vmatpush1.msra.mxu0 0.0
          %289 = vmatprep.subr.mxu0 0.0
          %290 = vmatpush1.msra.mxu0 0.0
          %291 = vmatprep.subr.mxu0 0.0
          %292 = vmatpush1.msra.mxu0 0.0
          %293 = vmatprep.subr.mxu0 0.0
          %294 = vmatpush1.msra.mxu0 0.0
          %295 = vmatprep.subr.mxu0 0.0
          %296 = vmatpush1.msra.mxu0 0.0
          %297 = vmatprep.subr.mxu0 0.0
          %298 = vmatpush1.msra.mxu0 0.0
          %299 = vmatprep.subr.mxu0 0.0
          %300 = vmatpush1.msra.mxu0 0.0
          %301 = vmatprep.subr.mxu0 0.0
          %302 = vmatpush1.msra.mxu0 0.0
          %303 = vmatprep.subr.mxu0 0.0
          %304 = vmatpush1.msra.mxu0 0.0
          %305 = vmatprep.subr.mxu0 0.0
          %306 = vmatpush1.msra.mxu0 0.0
          %307 = vmatprep.subr.mxu0 0.0
          %308 = vmatpush1.msra.mxu0 0.0
          %309 = vmatprep.subr.mxu0 0.0
          %310 = vmatpush1.msra.mxu0 0.0
          %311 = vmatprep.subr.mxu0 0.0
          %312 = vmatpush1.msra.mxu0 0.0
          %313 = vmatprep.subr.mxu0 0.0
          %314 = vmatpush1.msra.mxu0 0.0
          %315 = vmatprep.subr.mxu0 0.0
          %316 = vmatpush1.msra.mxu0 0.0
          %317 = vmatprep.subr.mxu0 0.0
          %318 = vmatpush1.msra.mxu0 0.0
          %319 = vmatprep.subr.mxu0 0.0
          %320 = vmatpush1.msra.mxu0 0.0
          %321 = vmatprep.subr.mxu0 0.0
          %322 = vmatpush1.msra.mxu0 0.0
          %323 = vmatprep.subr.mxu0 0.0
          %324 = vmatpush1.msra.mxu0 0.0
          %325 = vmatprep.subr.mxu0 0.0
          %326 = vmatpush1.msra.mxu0 0.0
          %327 = vmatprep.subr.mxu0 0.0
          %328 = vmatpush1.msra.mxu0 0.0
          %329 = vmatprep.subr.mxu0 0.0
          %330 = vmatpush1.msra.mxu0 0.0
          %331 = vmatprep.subr.mxu0 0.0
          %332 = vmatpush1.msra.mxu0 0.0
          %333 = vmatprep.subr.mxu0 0.0
          %334 = vmatpush1.msra.mxu0 0.0
          %335 = vmatprep.subr.mxu0 0.0
          %336 = vmatpush1.msra.mxu0 0.0
          %337 = vmatprep.subr.mxu0 0.0
          %338 = vmatpush1.msra.mxu0 0.0
          %339 = vmatprep.mubr.f32.mxu0 0.0
          %340 = vmatmul.mubr.f32.gmra.mrb[0].mxu0 %v273
          %v341 = vpop.f32.mrb[0].mxu0
          %v342 = vadd.f32 0.0, %v341
          %v343 = vpop.f32.mrb[0].mxu0
          %v344 = vadd.f32 0.0, %v343
          %345 = vdwg.mxu0
          %346 = vmatprep.subr.mxu0 %v242
          %347 = vmatpush1.msra.mxu0 %v241
          %348 = vmatprep.subr.mxu0 %v250
          %349 = vmatpush1.msra.mxu0 %v249
          %350 = vmatprep.subr.mxu0 %v258
          %351 = vmatpush1.msra.mxu0 %v257
          %352 = vmatprep.subr.mxu0 %v266
          %353 = vmatpush1.msra.mxu0 %v265
          %354 = vmatprep.subr.mxu0 0.0
          %355 = vmatpush1.msra.mxu0 0.0
          %356 = vmatprep.subr.mxu0 0.0
          %357 = vmatpush1.msra.mxu0 0.0
          %358 = vmatprep.subr.mxu0 0.0
          %359 = vmatpush1.msra.mxu0 0.0
          %360 = vmatprep.subr.mxu0 0.0
          %361 = vmatpush1.msra.mxu0 0.0
          %362 = vmatprep.subr.mxu0 0.0
          %363 = vmatpush1.msra.mxu0 0.0
          %364 = vmatprep.subr.mxu0 0.0
          %365 = vmatpush1.msra.mxu0 0.0
          %366 = vmatprep.subr.mxu0 0.0
          %367 = vmatpush1.msra.mxu0 0.0
          %368 = vmatprep.subr.mxu0 0.0
          %369 = vmatpush1.msra.mxu0 0.0
          %370 = vmatprep.subr.mxu0 0.0
          %371 = vmatpush1.msra.mxu0 0.0
          %372 = vmatprep.subr.mxu0 0.0
          %373 = vmatpush1.msra.mxu0 0.0
          %374 = vmatprep.subr.mxu0 0.0
          %375 = vmatpush1.msra.mxu0 0.0
          %376 = vmatprep.subr.mxu0 0.0
          %377 = vmatpush1.msra.mxu0 0.0
          %378 = vmatprep.subr.mxu0 0.0
          %379 = vmatpush1.msra.mxu0 0.0
          %380 = vmatprep.subr.mxu0 0.0
          %381 = vmatpush1.msra.mxu0 0.0
          %382 = vmatprep.subr.mxu0 0.0
          %383 = vmatpush1.msra.mxu0 0.0
          %384 = vmatprep.subr.mxu0 0.0
          %385 = vmatpush1.msra.mxu0 0.0
          %386 = vmatprep.subr.mxu0 0.0
          %387 = vmatpush1.msra.mxu0 0.0
          %388 = vmatprep.subr.mxu0 0.0
          %389 = vmatpush1.msra.mxu0 0.0
          %390 = vmatprep.subr.mxu0 0.0
          %391 = vmatpush1.msra.mxu0 0.0
          %392 = vmatprep.subr.mxu0 0.0
          %393 = vmatpush1.msra.mxu0 0.0
          %394 = vmatprep.subr.mxu0 0.0
          %395 = vmatpush1.msra.mxu0 0.0
          %396 = vmatprep.subr.mxu0 0.0
          %397 = vmatpush1.msra.mxu0 0.0
          %398 = vmatprep.subr.mxu0 0.0
          %399 = vmatpush1.msra.mxu0 0.0
          %400 = vmatprep.subr.mxu0 0.0
          %401 = vmatpush1.msra.mxu0 0.0
          %402 = vmatprep.subr.mxu0 0.0
          %403 = vmatpush1.msra.mxu0 0.0
          %404 = vmatprep.subr.mxu0 0.0
          %405 = vmatpush1.msra.mxu0 0.0
          %406 = vmatprep.subr.mxu0 0.0
          %407 = vmatpush1.msra.mxu0 0.0
          %408 = vmatprep.subr.mxu0 0.0
          %409 = vmatpush1.msra.mxu0 0.0
          %410 = vmatprep.mubr.f32.mxu0 0.0
          %411 = vmatmul.mubr.f32.gmra.mrb[0].mxu0 %v273
          %v412 = vpop.f32.mrb[0].mxu0
          %v413 = vadd.f32 0.0, %v412
          %v414 = vpop.f32.mrb[0].mxu0
          %v415 = vadd.f32 0.0, %v414
          %416 = vdwg.mxu0
          %417 = vmatprep.subr.mxu0 %v244
          %418 = vmatpush1.msra.mxu0 %v243
          %419 = vmatprep.subr.mxu0 %v252
          %420 = vmatpush1.msra.mxu0 %v251
          %421 = vmatprep.subr.mxu0 %v260
          %422 = vmatpush1.msra.mxu0 %v259
          %423 = vmatprep.subr.mxu0 %v268
          %424 = vmatpush1.msra.mxu0 %v267
          %425 = vmatprep.subr.mxu0 0.0
          %426 = vmatpush1.msra.mxu0 0.0
          %427 = vmatprep.subr.mxu0 0.0
          %428 = vmatpush1.msra.mxu0 0.0
          %429 = vmatprep.subr.mxu0 0.0
          %430 = vmatpush1.msra.mxu0 0.0
          %431 = vmatprep.subr.mxu0 0.0
          %432 = vmatpush1.msra.mxu0 0.0
          %433 = vmatprep.subr.mxu0 0.0
          %434 = vmatpush1.msra.mxu0 0.0
          %435 = vmatprep.subr.mxu0 0.0
          %436 = vmatpush1.msra.mxu0 0.0
          %437 = vmatprep.subr.mxu0 0.0
          %438 = vmatpush1.msra.mxu0 0.0
          %439 = vmatprep.subr.mxu0 0.0
          %440 = vmatpush1.msra.mxu0 0.0
          %441 = vmatprep.subr.mxu0 0.0
          %442 = vmatpush1.msra.mxu0 0.0
          %443 = vmatprep.subr.mxu0 0.0
          %444 = vmatpush1.msra.mxu0 0.0
          %445 = vmatprep.subr.mxu0 0.0
          %446 = vmatpush1.msra.mxu0 0.0
          %447 = vmatprep.subr.mxu0 0.0
          %448 = vmatpush1.msra.mxu0 0.0
          %449 = vmatprep.subr.mxu0 0.0
          %450 = vmatpush1.msra.mxu0 0.0
          %451 = vmatprep.subr.mxu0 0.0
          %452 = vmatpush1.msra.mxu0 0.0
          %453 = vmatprep.subr.mxu0 0.0
          %454 = vmatpush1.msra.mxu0 0.0
          %455 = vmatprep.subr.mxu0 0.0
          %456 = vmatpush1.msra.mxu0 0.0
          %457 = vmatprep.subr.mxu0 0.0
          %458 = vmatpush1.msra.mxu0 0.0
          %459 = vmatprep.subr.mxu0 0.0
          %460 = vmatpush1.msra.mxu0 0.0
          %461 = vmatprep.subr.mxu0 0.0
          %462 = vmatpush1.msra.mxu0 0.0
          %463 = vmatprep.subr.mxu0 0.0
          %464 = vmatpush1.msra.mxu0 0.0
          %465 = vmatprep.subr.mxu0 0.0
          %466 = vmatpush1.msra.mxu0 0.0
          %467 = vmatprep.subr.mxu0 0.0
          %468 = vmatpush1.msra.mxu0 0.0
          %469 = vmatprep.subr.mxu0 0.0
          %470 = vmatpush1.msra.mxu0 0.0
          %471 = vmatprep.subr.mxu0 0.0
          %472 = vmatpush1.msra.mxu0 0.0
          %473 = vmatprep.subr.mxu0 0.0
          %474 = vmatpush1.msra.mxu0 0.0
          %475 = vmatprep.subr.mxu0 0.0
          %476 = vmatpush1.msra.mxu0 0.0
          %477 = vmatprep.subr.mxu0 0.0
          %478 = vmatpush1.msra.mxu0 0.0
          %479 = vmatprep.subr.mxu0 0.0
          %480 = vmatpush1.msra.mxu0 0.0
          %481 = vmatprep.mubr.f32.mxu0 0.0
          %482 = vmatmul.mubr.f32.gmra.mrb[0].mxu0 %v273
          %v483 = vpop.f32.mrb[0].mxu0
          %v484 = vadd.f32 0.0, %v483
          %v485 = vpop.f32.mrb[0].mxu0
          %v486 = vadd.f32 0.0, %v485
          %487 = vdwg.mxu0
          %488 = vmatprep.subr.mxu0 %v246
          %489 = vmatpush1.msra.mxu0 %v245
          %490 = vmatprep.subr.mxu0 %v254
          %491 = vmatpush1.msra.mxu0 %v253
          %492 = vmatprep.subr.mxu0 %v262
          %493 = vmatpush1.msra.mxu0 %v261
          %494 = vmatprep.subr.mxu0 %v270
          %495 = vmatpush1.msra.mxu0 %v269
          %496 = vmatprep.subr.mxu0 0.0
          %497 = vmatpush1.msra.mxu0 0.0
          %498 = vmatprep.subr.mxu0 0.0
          %499 = vmatpush1.msra.mxu0 0.0
          %500 = vmatprep.subr.mxu0 0.0
          %501 = vmatpush1.msra.mxu0 0.0
          %502 = vmatprep.subr.mxu0 0.0
          %503 = vmatpush1.msra.mxu0 0.0
          %504 = vmatprep.subr.mxu0 0.0
          %505 = vmatpush1.msra.mxu0 0.0
          %506 = vmatprep.subr.mxu0 0.0
          %507 = vmatpush1.msra.mxu0 0.0
          %508 = vmatprep.subr.mxu0 0.0
          %509 = vmatpush1.msra.mxu0 0.0
          %510 = vmatprep.subr.mxu0 0.0
          %511 = vmatpush1.msra.mxu0 0.0
          %512 = vmatprep.subr.mxu0 0.0
          %513 = vmatpush1.msra.mxu0 0.0
          %514 = vmatprep.subr.mxu0 0.0
          %515 = vmatpush1.msra.mxu0 0.0
          %516 = vmatprep.subr.mxu0 0.0
          %517 = vmatpush1.msra.mxu0 0.0
          %518 = vmatprep.subr.mxu0 0.0
          %519 = vmatpush1.msra.mxu0 0.0
          %520 = vmatprep.subr.mxu0 0.0
          %521 = vmatpush1.msra.mxu0 0.0
          %522 = vmatprep.subr.mxu0 0.0
          %523 = vmatpush1.msra.mxu0 0.0
          %524 = vmatprep.subr.mxu0 0.0
          %525 = vmatpush1.msra.mxu0 0.0
          %526 = vmatprep.subr.mxu0 0.0
          %527 = vmatpush1.msra.mxu0 0.0
          %528 = vmatprep.subr.mxu0 0.0
          %529 = vmatpush1.msra.mxu0 0.0
          %530 = vmatprep.subr.mxu0 0.0
          %531 = vmatpush1.msra.mxu0 0.0
          %532 = vmatprep.subr.mxu0 0.0
          %533 = vmatpush1.msra.mxu0 0.0
          %534 = vmatprep.subr.mxu0 0.0
          %535 = vmatpush1.msra.mxu0 0.0
          %536 = vmatprep.subr.mxu0 0.0
          %537 = vmatpush1.msra.mxu0 0.0
          %538 = vmatprep.subr.mxu0 0.0
          %539 = vmatpush1.msra.mxu0 0.0
          %540 = vmatprep.subr.mxu0 0.0
          %541 = vmatpush1.msra.mxu0 0.0
          %542 = vmatprep.subr.mxu0 0.0
          %543 = vmatpush1.msra.mxu0 0.0
          %544 = vmatprep.subr.mxu0 0.0
          %545 = vmatpush1.msra.mxu0 0.0
          %546 = vmatprep.subr.mxu0 0.0
          %547 = vmatpush1.msra.mxu0 0.0
          %548 = vmatprep.subr.mxu0 0.0
          %549 = vmatpush1.msra.mxu0 0.0
          %550 = vmatprep.subr.mxu0 0.0
          %551 = vmatpush1.msra.mxu0 0.0
          %552 = vmatprep.mubr.f32.mxu0 0.0
          %553 = vmatmul.mubr.f32.gmra.mrb[0].mxu0 %v273
          %v554 = vpop.f32.mrb[0].mxu0
          %v555 = vadd.f32 0.0, %v554
          %v556 = vpop.f32.mrb[0].mxu0
          %v557 = vadd.f32 0.0, %v556
          %558 = vdwg.mxu0
          %559 = vst [vmem:[#allocation2] sm:$0xff] %v342
          %560 = vst [vmem:[#allocation2 + $0x8] sm:$0xff] %v344
          %561 = vst [vmem:[#allocation2 + $0x10] sm:$0xff] %v413
          %562 = vst [vmem:[#allocation2 + $0x18] sm:$0xff] %v415
          %563 = vst [vmem:[#allocation2 + $0x20] sm:$0xff] %v484
          %564 = vst [vmem:[#allocation2 + $0x28] sm:$0xff] %v486
          %565 = vst [vmem:[#allocation2 + $0x30] sm:$0xff] %v555
          %566 = vst [vmem:[#allocation2 + $0x38] sm:$0xff] %v557
        $region44: #{tpu_custom_call.1} parent=39 // pred_fallthru
          _
        %s567 = smul.u32 %s24, 8
        %s568 = scalar_lea.vmem %s233, %s567
        %v569 = vld [vmem:[%s568] sm:$0xff]
        %v570 = vld [vmem:[%s1] sm:$0xff]
        %v571 = vld [vmem:[%s1 + $0x8] sm:$0xff]
        %v572 = vld [vmem:[%s1 + $0x10] sm:$0xff]
        %v573 = vld [vmem:[%s1 + $0x18] sm:$0xff]
        %v574 = vld [vmem:[%s1 + $0x20] sm:$0xff]
        %v575 = vld [vmem:[%s1 + $0x28] sm:$0xff]
        %v576 = vld [vmem:[%s1 + $0x30] sm:$0xff]
        %v577 = vld [vmem:[%s1 + $0x38] sm:$0xff]
        %v578 = vld [vmem:[%s1 + $0x40] sm:$0xff]
        %v579 = vld [vmem:[%s1 + $0x48] sm:$0xff]
        %v580 = vld [vmem:[%s1 + $0x50] sm:$0xff]
        %v581 = vld [vmem:[%s1 + $0x58] sm:$0xff]
        %v582 = vld [vmem:[%s1 + $0x60] sm:$0xff]
        %v583 = vld [vmem:[%s1 + $0x68] sm:$0xff]
        %v584 = vld [vmem:[%s1 + $0x70] sm:$0xff]
        %v585 = vld [vmem:[%s1 + $0x78] sm:$0xff]
        %vm586 = vcmask 261120
        %v588 = vsel %vm586, %v569, 0
        %590 = vmatprep.subr.mxu0 %v571
        %591 = vmatpush1.msra.mxu0 %v570
        %592 = vmatprep.subr.mxu0 %v575
        %593 = vmatpush1.msra.mxu0 %v574
        %594 = vmatprep.subr.mxu0 %v579
        %595 = vmatpush1.msra.mxu0 %v578
        %596 = vmatprep.subr.mxu0 %v583
        %597 = vmatpush1.msra.mxu0 %v582
        %598 = vmatprep.subr.mxu0 0.0
        %599 = vmatpush1.msra.mxu0 0.0
        %600 = vmatprep.subr.mxu0 0.0
        %601 = vmatpush1.msra.mxu0 0.0
        %602 = vmatprep.subr.mxu0 0.0
        %603 = vmatpush1.msra.mxu0 0.0
        %604 = vmatprep.subr.mxu0 0.0
        %605 = vmatpush1.msra.mxu0 0.0
        %606 = vmatprep.subr.mxu0 0.0
        %607 = vmatpush1.msra.mxu0 0.0
        %608 = vmatprep.subr.mxu0 0.0
        %609 = vmatpush1.msra.mxu0 0.0
        %610 = vmatprep.subr.mxu0 0.0
        %611 = vmatpush1.msra.mxu0 0.0
        %612 = vmatprep.subr.mxu0 0.0
        %613 = vmatpush1.msra.mxu0 0.0
        %614 = vmatprep.subr.mxu0 0.0
        %615 = vmatpush1.msra.mxu0 0.0
        %616 = vmatprep.subr.mxu0 0.0
        %617 = vmatpush1.msra.mxu0 0.0
        %618 = vmatprep.subr.mxu0 0.0
        %619 = vmatpush1.msra.mxu0 0.0
        %620 = vmatprep.subr.mxu0 0.0
        %621 = vmatpush1.msra.mxu0 0.0
        %622 = vmatprep.subr.mxu0 0.0
        %623 = vmatpush1.msra.mxu0 0.0
        %624 = vmatprep.subr.mxu0 0.0
        %625 = vmatpush1.msra.mxu0 0.0
        %626 = vmatprep.subr.mxu0 0.0
        %627 = vmatpush1.msra.mxu0 0.0
        %628 = vmatprep.subr.mxu0 0.0
        %629 = vmatpush1.msra.mxu0 0.0
        %630 = vmatprep.subr.mxu0 0.0
        %631 = vmatpush1.msra.mxu0 0.0
        %632 = vmatprep.subr.mxu0 0.0
        %633 = vmatpush1.msra.mxu0 0.0
        %634 = vmatprep.subr.mxu0 0.0
        %635 = vmatpush1.msra.mxu0 0.0
        %636 = vmatprep.subr.mxu0 0.0
        %637 = vmatpush1.msra.mxu0 0.0
        %638 = vmatprep.subr.mxu0 0.0
        %639 = vmatpush1.msra.mxu0 0.0
        %640 = vmatprep.subr.mxu0 0.0
        %641 = vmatpush1.msra.mxu0 0.0
        %642 = vmatprep.subr.mxu0 0.0
        %643 = vmatpush1.msra.mxu0 0.0
        %644 = vmatprep.subr.mxu0 0.0
        %645 = vmatpush1.msra.mxu0 0.0
        %646 = vmatprep.subr.mxu0 0.0
        %647 = vmatpush1.msra.mxu0 0.0
        %648 = vmatprep.subr.mxu0 0.0
        %649 = vmatpush1.msra.mxu0 0.0
        %650 = vmatprep.subr.mxu0 0.0
        %651 = vmatpush1.msra.mxu0 0.0
        %652 = vmatprep.subr.mxu0 0.0
        %653 = vmatpush1.msra.mxu0 0.0
        %654 = vmatprep.mubr.f32.mxu0 0.0
        %655 = vmatmul.mubr.f32.gmra.mrb[0].mxu0 %v588
        %v656 = vpop.f32.mrb[0].mxu0
        %v657 = vadd.f32 0.0, %v656
        %v658 = vpop.f32.mrb[0].mxu0
        %v659 = vadd.f32 0.0, %v658
        %660 = vdwg.mxu0
        %661 = vmatprep.subr.mxu0 %v573
        %662 = vmatpush1.msra.mxu0 %v572
        %663 = vmatprep.subr.mxu0 %v577
        %664 = vmatpush1.msra.mxu0 %v576
        %665 = vmatprep.subr.mxu0 %v581
        %666 = vmatpush1.msra.mxu0 %v580
        %667 = vmatprep.subr.mxu0 %v585
        %668 = vmatpush1.msra.mxu0 %v584
        %669 = vmatprep.subr.mxu0 0.0
        %670 = vmatpush1.msra.mxu0 0.0
        %671 = vmatprep.subr.mxu0 0.0
        %672 = vmatpush1.msra.mxu0 0.0
        %673 = vmatprep.subr.mxu0 0.0
        %674 = vmatpush1.msra.mxu0 0.0
        %675 = vmatprep.subr.mxu0 0.0
        %676 = vmatpush1.msra.mxu0 0.0
        %677 = vmatprep.subr.mxu0 0.0
        %678 = vmatpush1.msra.mxu0 0.0
        %679 = vmatprep.subr.mxu0 0.0
        %680 = vmatpush1.msra.mxu0 0.0
        %681 = vmatprep.subr.mxu0 0.0
        %682 = vmatpush1.msra.mxu0 0.0
        %683 = vmatprep.subr.mxu0 0.0
        %684 = vmatpush1.msra.mxu0 0.0
        %685 = vmatprep.subr.mxu0 0.0
        %686 = vmatpush1.msra.mxu0 0.0
        %687 = vmatprep.subr.mxu0 0.0
        %688 = vmatpush1.msra.mxu0 0.0
        %689 = vmatprep.subr.mxu0 0.0
        %690 = vmatpush1.msra.mxu0 0.0
        %691 = vmatprep.subr.mxu0 0.0
        %692 = vmatpush1.msra.mxu0 0.0
        %693 = vmatprep.subr.mxu0 0.0
        %694 = vmatpush1.msra.mxu0 0.0
        %695 = vmatprep.subr.mxu0 0.0
        %696 = vmatpush1.msra.mxu0 0.0
        %697 = vmatprep.subr.mxu0 0.0
        %698 = vmatpush1.msra.mxu0 0.0
        %699 = vmatprep.subr.mxu0 0.0
        %700 = vmatpush1.msra.mxu0 0.0
        %701 = vmatprep.subr.mxu0 0.0
        %702 = vmatpush1.msra.mxu0 0.0
        %703 = vmatprep.subr.mxu0 0.0
        %704 = vmatpush1.msra.mxu0 0.0
        %705 = vmatprep.subr.mxu0 0.0
        %706 = vmatpush1.msra.mxu0 0.0
        %707 = vmatprep.subr.mxu0 0.0
        %708 = vmatpush1.msra.mxu0 0.0
        %709 = vmatprep.subr.mxu0 0.0
        %710 = vmatpush1.msra.mxu0 0.0
        %711 = vmatprep.subr.mxu0 0.0
        %712 = vmatpush1.msra.mxu0 0.0
        %713 = vmatprep.subr.mxu0 0.0
        %714 = vmatpush1.msra.mxu0 0.0
        %715 = vmatprep.subr.mxu0 0.0
        %716 = vmatpush1.msra.mxu0 0.0
        %717 = vmatprep.subr.mxu0 0.0
        %718 = vmatpush1.msra.mxu0 0.0
        %719 = vmatprep.subr.mxu0 0.0
        %720 = vmatpush1.msra.mxu0 0.0
        %721 = vmatprep.subr.mxu0 0.0
        %722 = vmatpush1.msra.mxu0 0.0
        %723 = vmatprep.subr.mxu0 0.0
        %724 = vmatpush1.msra.mxu0 0.0
        %725 = vmatprep.mubr.f32.mxu0 0.0
        %726 = vmatmul.mubr.f32.gmra.mrb[0].mxu0 %v588
        %v727 = vpop.f32.mrb[0].mxu0
        %v728 = vadd.f32 0.0, %v727
        %v729 = vpop.f32.mrb[0].mxu0
        %v730 = vadd.f32 0.0, %v729
        %731 = vdwg.mxu0
        %v732 = vld [vmem:[#allocation2] sm:$0xff]
        %v733 = vld [vmem:[#allocation2 + $0x20] sm:$0xff]
        %734 = vmatprep.subr.mxu0 0.0
        %735 = vmatpush1.xpose.msra.mxu0 %v732
        %736 = vmatprep.subr.mxu0 0.0
        %737 = vmatpush1.xpose.msra.mxu0 0.0
        %738 = vmatprep.subr.mxu0 0.0
        %739 = vmatpush1.xpose.msra.mxu0 0.0
        %740 = vmatprep.subr.mxu0 0.0
        %741 = vmatpush1.xpose.msra.mxu0 0.0
        %742 = vmatprep.subr.mxu0 0.0
        %743 = vmatpush1.xpose.msra.mxu0 0.0
        %744 = vmatprep.subr.mxu0 0.0
        %745 = vmatpush1.xpose.msra.mxu0 0.0
        %746 = vmatprep.subr.mxu0 0.0
        %747 = vmatpush1.xpose.msra.mxu0 0.0
        %748 = vmatprep.subr.mxu0 0.0
        %749 = vmatpush1.xpose.msra.mxu0 0.0
        %750 = vmatprep.subr.mxu0 0.0
        %751 = vmatpush1.xpose.msra.mxu0 0.0
        %752 = vmatprep.subr.mxu0 0.0
        %753 = vmatpush1.xpose.msra.mxu0 0.0
        %754 = vmatprep.subr.mxu0 0.0
        %755 = vmatpush1.xpose.msra.mxu0 0.0
        %756 = vmatprep.subr.mxu0 0.0
        %757 = vmatpush1.xpose.msra.mxu0 0.0
        %758 = vmatprep.subr.mxu0 0.0
        %759 = vmatpush1.xpose.msra.mxu0 0.0
        %760 = vmatprep.subr.mxu0 0.0
        %761 = vmatpush1.xpose.msra.mxu0 0.0
        %762 = vmatprep.subr.mxu0 0.0
        %763 = vmatpush1.xpose.msra.mxu0 0.0
        %764 = vmatprep.subr.mxu0 0.0
        %765 = vmatpush1.xpose.msra.mxu0 0.0
        %766 = vmatprep.subr.mxu0 0.0
        %767 = vmatpush1.xpose.msra.mxu0 0.0
        %768 = vmatprep.subr.mxu0 0.0
        %769 = vmatpush1.xpose.msra.mxu0 0.0
        %770 = vmatprep.subr.mxu0 0.0
        %771 = vmatpush1.xpose.msra.mxu0 0.0
        %772 = vmatprep.subr.mxu0 0.0
        %773 = vmatpush1.xpose.msra.mxu0 0.0
        %774 = vmatprep.subr.mxu0 0.0
        %775 = vmatpush1.xpose.msra.mxu0 0.0
        %776 = vmatprep.subr.mxu0 0.0
        %777 = vmatpush1.xpose.msra.mxu0 0.0
        %778 = vmatprep.subr.mxu0 0.0
        %779 = vmatpush1.xpose.msra.mxu0 0.0
        %780 = vmatprep.subr.mxu0 0.0
        %781 = vmatpush1.xpose.msra.mxu0 0.0
        %782 = vmatprep.subr.mxu0 0.0
        %783 = vmatpush1.xpose.msra.mxu0 0.0
        %784 = vmatprep.subr.mxu0 0.0
        %785 = vmatpush1.xpose.msra.mxu0 0.0
        %786 = vmatprep.subr.mxu0 0.0
        %787 = vmatpush1.xpose.msra.mxu0 0.0
        %788 = vmatprep.subr.mxu0 0.0
        %789 = vmatpush1.xpose.msra.mxu0 0.0
        %790 = vmatprep.subr.mxu0 0.0
        %791 = vmatpush1.xpose.msra.mxu0 0.0
        %792 = vmatprep.subr.mxu0 0.0
        %793 = vmatpush1.xpose.msra.mxu0 0.0
        %794 = vmatprep.subr.mxu0 0.0
        %795 = vmatpush1.xpose.msra.mxu0 0.0
        %796 = vmatprep.subr.mxu0 0.0
        %797 = vmatpush1.xpose.msra.mxu0 0.0
        %798 = vmatprep.mubr.f32.mxu0 0.0
        %799 = vmatmul.mubr.f32.gmra.mrb[0].mxu0 %v657
        %v800 = vpop.f32.mrb[0].mxu0
        %v801 = vadd.f32 0.0, %v800
        %v802 = vpop.f32.mrb[0].mxu0
        %803 = vdwg.mxu0
        %vm804 = vcmask 64512
        %v805 = vsel %vm804, %v801, -inf
        %806 = vmax.xlane.f32.xlu0 %v805
        %v807 = vpop.xlane.xlu0 %806
        %v808 = vsub.f32 %v801, %v807
        %v809 = vmul.f32 %v808, 1.442695
        %v810 = vpow.pop %v809
        %v812 = vsel %vm804, %v810, 0
        %814 = vmatprep.subr.mxu0 0.0
        %815 = vmatpush1.msra.mxu0 %v733
        %816 = vmatprep.subr.mxu0 0.0
        %817 = vmatpush1.msra.mxu0 0.0
        %818 = vmatprep.subr.mxu0 0.0
        %819 = vmatpush1.msra.mxu0 0.0
        %820 = vmatprep.subr.mxu0 0.0
        %821 = vmatpush1.msra.mxu0 0.0
        %822 = vmatprep.subr.mxu0 0.0
        %823 = vmatpush1.msra.mxu0 0.0
        %824 = vmatprep.subr.mxu0 0.0
        %825 = vmatpush1.msra.mxu0 0.0
        %826 = vmatprep.subr.mxu0 0.0
        %827 = vmatpush1.msra.mxu0 0.0
        %828 = vmatprep.subr.mxu0 0.0
        %829 = vmatpush1.msra.mxu0 0.0
        %830 = vmatprep.subr.mxu0 0.0
        %831 = vmatpush1.msra.mxu0 0.0
        %832 = vmatprep.subr.mxu0 0.0
        %833 = vmatpush1.msra.mxu0 0.0
        %834 = vmatprep.subr.mxu0 0.0
        %835 = vmatpush1.msra.mxu0 0.0
        %836 = vmatprep.subr.mxu0 0.0
        %837 = vmatpush1.msra.mxu0 0.0
        %838 = vmatprep.subr.mxu0 0.0
        %839 = vmatpush1.msra.mxu0 0.0
        %840 = vmatprep.subr.mxu0 0.0
        %841 = vmatpush1.msra.mxu0 0.0
        %842 = vmatprep.subr.mxu0 0.0
        %843 = vmatpush1.msra.mxu0 0.0
        %844 = vmatprep.subr.mxu0 0.0
        %845 = vmatpush1.msra.mxu0 0.0
        %846 = vmatprep.subr.mxu0 0.0
        %847 = vmatpush1.msra.mxu0 0.0
        %848 = vmatprep.subr.mxu0 0.0
        %849 = vmatpush1.msra.mxu0 0.0
        %850 = vmatprep.subr.mxu0 0.0
        %851 = vmatpush1.msra.mxu0 0.0
        %852 = vmatprep.subr.mxu0 0.0
        %853 = vmatpush1.msra.mxu0 0.0
        %854 = vmatprep.subr.mxu0 0.0
        %855 = vmatpush1.msra.mxu0 0.0
        %856 = vmatprep.subr.mxu0 0.0
        %857 = vmatpush1.msra.mxu0 0.0
        %858 = vmatprep.subr.mxu0 0.0
        %859 = vmatpush1.msra.mxu0 0.0
        %860 = vmatprep.subr.mxu0 0.0
        %861 = vmatpush1.msra.mxu0 0.0
        %862 = vmatprep.subr.mxu0 0.0
        %863 = vmatpush1.msra.mxu0 0.0
        %864 = vmatprep.subr.mxu0 0.0
        %865 = vmatpush1.msra.mxu0 0.0
        %866 = vmatprep.subr.mxu0 0.0
        %867 = vmatpush1.msra.mxu0 0.0
        %868 = vmatprep.subr.mxu0 0.0
        %869 = vmatpush1.msra.mxu0 0.0
        %870 = vmatprep.subr.mxu0 0.0
        %871 = vmatpush1.msra.mxu0 0.0
        %872 = vmatprep.subr.mxu0 0.0
        %873 = vmatpush1.msra.mxu0 0.0
        %874 = vmatprep.subr.mxu0 0.0
        %875 = vmatpush1.msra.mxu0 0.0
        %876 = vmatprep.subr.mxu0 0.0
        %877 = vmatpush1.msra.mxu0 0.0
        %878 = vmatprep.mubr.f32.mxu0 0.0
        %879 = vmatmul.mubr.f32.gmra.mrb[0].mxu0 %v812
        %v880 = vpop.f32.mrb[0].mxu0
        %v881 = vadd.f32 0.0, %v880
        %v882 = vpop.f32.mrb[0].mxu0
        %883 = vdwg.mxu0
        %v884 = vsel %vm804, %v810, 0.0
        %885 = vadd.xlane.f32.xlu0 %v884
        %v886 = vpop.xlane.xlu0 %885
        %v887 = vrcp.pop %v886
        %v888 = vmul.f32 %v881, %v887
        %889 = vst [vmem:[#allocation3] sm:$0xff] %v888
        %v890 = vld [vmem:[#allocation2 + $0x8] sm:$0xff]
        %v891 = vld [vmem:[#allocation2 + $0x28] sm:$0xff]
        %892 = vmatprep.subr.mxu0 0.0
        %893 = vmatpush1.xpose.msra.mxu0 %v890
        %894 = vmatprep.subr.mxu0 0.0
        %895 = vmatpush1.xpose.msra.mxu0 0.0
        %896 = vmatprep.subr.mxu0 0.0
        %897 = vmatpush1.xpose.msra.mxu0 0.0
        %898 = vmatprep.subr.mxu0 0.0
        %899 = vmatpush1.xpose.msra.mxu0 0.0
        %900 = vmatprep.subr.mxu0 0.0
        %901 = vmatpush1.xpose.msra.mxu0 0.0
        %902 = vmatprep.subr.mxu0 0.0
        %903 = vmatpush1.xpose.msra.mxu0 0.0
        %904 = vmatprep.subr.mxu0 0.0
        %905 = vmatpush1.xpose.msra.mxu0 0.0
        %906 = vmatprep.subr.mxu0 0.0
        %907 = vmatpush1.xpose.msra.mxu0 0.0
        %908 = vmatprep.subr.mxu0 0.0
        %909 = vmatpush1.xpose.msra.mxu0 0.0
        %910 = vmatprep.subr.mxu0 0.0
        %911 = vmatpush1.xpose.msra.mxu0 0.0
        %912 = vmatprep.subr.mxu0 0.0
        %913 = vmatpush1.xpose.msra.mxu0 0.0
        %914 = vmatprep.subr.mxu0 0.0
        %915 = vmatpush1.xpose.msra.mxu0 0.0
        %916 = vmatprep.subr.mxu0 0.0
        %917 = vmatpush1.xpose.msra.mxu0 0.0
        %918 = vmatprep.subr.mxu0 0.0
        %919 = vmatpush1.xpose.msra.mxu0 0.0
        %920 = vmatprep.subr.mxu0 0.0
        %921 = vmatpush1.xpose.msra.mxu0 0.0
        %922 = vmatprep.subr.mxu0 0.0
        %923 = vmatpush1.xpose.msra.mxu0 0.0
        %924 = vmatprep.subr.mxu0 0.0
        %925 = vmatpush1.xpose.msra.mxu0 0.0
        %926 = vmatprep.subr.mxu0 0.0
        %927 = vmatpush1.xpose.msra.mxu0 0.0
        %928 = vmatprep.subr.mxu0 0.0
        %929 = vmatpush1.xpose.msra.mxu0 0.0
        %930 = vmatprep.subr.mxu0 0.0
        %931 = vmatpush1.xpose.msra.mxu0 0.0
        %932 = vmatprep.subr.mxu0 0.0
        %933 = vmatpush1.xpose.msra.mxu0 0.0
        %934 = vmatprep.subr.mxu0 0.0
        %935 = vmatpush1.xpose.msra.mxu0 0.0
        %936 = vmatprep.subr.mxu0 0.0
        %937 = vmatpush1.xpose.msra.mxu0 0.0
        %938 = vmatprep.subr.mxu0 0.0
        %939 = vmatpush1.xpose.msra.mxu0 0.0
        %940 = vmatprep.subr.mxu0 0.0
        %941 = vmatpush1.xpose.msra.mxu0 0.0
        %942 = vmatprep.subr.mxu0 0.0
        %943 = vmatpush1.xpose.msra.mxu0 0.0
        %944 = vmatprep.subr.mxu0 0.0
        %945 = vmatpush1.xpose.msra.mxu0 0.0
        %946 = vmatprep.subr.mxu0 0.0
        %947 = vmatpush1.xpose.msra.mxu0 0.0
        %948 = vmatprep.subr.mxu0 0.0
        %949 = vmatpush1.xpose.msra.mxu0 0.0
        %950 = vmatprep.subr.mxu0 0.0
        %951 = vmatpush1.xpose.msra.mxu0 0.0
        %952 = vmatprep.subr.mxu0 0.0
        %953 = vmatpush1.xpose.msra.mxu0 0.0
        %954 = vmatprep.subr.mxu0 0.0
        %955 = vmatpush1.xpose.msra.mxu0 0.0
        %956 = vmatprep.mubr.f32.mxu0 0.0
        %957 = vmatmul.mubr.f32.gmra.mrb[0].mxu0 %v659
        %v958 = vpop.f32.mrb[0].mxu0
        %v959 = vadd.f32 0.0, %v958
        %v960 = vpop.f32.mrb[0].mxu0
        %961 = vdwg.mxu0
        %v962 = vsel %vm804, %v959, -inf
        %963 = vmax.xlane.f32.xlu0 %v962
        %v964 = vpop.xlane.xlu0 %963
        %v965 = vsub.f32 %v959, %v964
        %v966 = vmul.f32 %v965, 1.442695
        %v967 = vpow.pop %v966
        %v969 = vsel %vm804, %v967, 0
        %971 = vmatprep.subr.mxu0 0.0
        %972 = vmatpush1.msra.mxu0 %v891
        %973 = vmatprep.subr.mxu0 0.0
        %974 = vmatpush1.msra.mxu0 0.0
        %975 = vmatprep.subr.mxu0 0.0
        %976 = vmatpush1.msra.mxu0 0.0
        %977 = vmatprep.subr.mxu0 0.0
        %978 = vmatpush1.msra.mxu0 0.0
        %979 = vmatprep.subr.mxu0 0.0
        %980 = vmatpush1.msra.mxu0 0.0
        %981 = vmatprep.subr.mxu0 0.0
        %982 = vmatpush1.msra.mxu0 0.0
        %983 = vmatprep.subr.mxu0 0.0
        %984 = vmatpush1.msra.mxu0 0.0
        %985 = vmatprep.subr.mxu0 0.0
        %986 = vmatpush1.msra.mxu0 0.0
        %987 = vmatprep.subr.mxu0 0.0
        %988 = vmatpush1.msra.mxu0 0.0
        %989 = vmatprep.subr.mxu0 0.0
        %990 = vmatpush1.msra.mxu0 0.0
        %991 = vmatprep.subr.mxu0 0.0
        %992 = vmatpush1.msra.mxu0 0.0
        %993 = vmatprep.subr.mxu0 0.0
        %994 = vmatpush1.msra.mxu0 0.0
        %995 = vmatprep.subr.mxu0 0.0
        %996 = vmatpush1.msra.mxu0 0.0
        %997 = vmatprep.subr.mxu0 0.0
        %998 = vmatpush1.msra.mxu0 0.0
        %999 = vmatprep.subr.mxu0 0.0
        %1000 = vmatpush1.msra.mxu0 0.0
        %1001 = vmatprep.subr.mxu0 0.0
        %1002 = vmatpush1.msra.mxu0 0.0
        %1003 = vmatprep.subr.mxu0 0.0
        %1004 = vmatpush1.msra.mxu0 0.0
        %1005 = vmatprep.subr.mxu0 0.0
        %1006 = vmatpush1.msra.mxu0 0.0
        %1007 = vmatprep.subr.mxu0 0.0
        %1008 = vmatpush1.msra.mxu0 0.0
        %1009 = vmatprep.subr.mxu0 0.0
        %1010 = vmatpush1.msra.mxu0 0.0
        %1011 = vmatprep.subr.mxu0 0.0
        %1012 = vmatpush1.msra.mxu0 0.0
        %1013 = vmatprep.subr.mxu0 0.0
        %1014 = vmatpush1.msra.mxu0 0.0
        %1015 = vmatprep.subr.mxu0 0.0
        %1016 = vmatpush1.msra.mxu0 0.0
        %1017 = vmatprep.subr.mxu0 0.0
        %1018 = vmatpush1.msra.mxu0 0.0
        %1019 = vmatprep.subr.mxu0 0.0
        %1020 = vmatpush1.msra.mxu0 0.0
        %1021 = vmatprep.subr.mxu0 0.0
        %1022 = vmatpush1.msra.mxu0 0.0
        %1023 = vmatprep.subr.mxu0 0.0
        %1024 = vmatpush1.msra.mxu0 0.0
        %1025 = vmatprep.subr.mxu0 0.0
        %1026 = vmatpush1.msra.mxu0 0.0
        %1027 = vmatprep.subr.mxu0 0.0
        %1028 = vmatpush1.msra.mxu0 0.0
        %1029 = vmatprep.subr.mxu0 0.0
        %1030 = vmatpush1.msra.mxu0 0.0
        %1031 = vmatprep.subr.mxu0 0.0
        %1032 = vmatpush1.msra.mxu0 0.0
        %1033 = vmatprep.subr.mxu0 0.0
        %1034 = vmatpush1.msra.mxu0 0.0
        %1035 = vmatprep.mubr.f32.mxu0 0.0
        %1036 = vmatmul.mubr.f32.gmra.mrb[0].mxu0 %v969
        %v1037 = vpop.f32.mrb[0].mxu0
        %v1038 = vadd.f32 0.0, %v1037
        %v1039 = vpop.f32.mrb[0].mxu0
        %1040 = vdwg.mxu0
        %v1041 = vsel %vm804, %v967, 0.0
        %1042 = vadd.xlane.f32.xlu0 %v1041
        %v1043 = vpop.xlane.xlu0 %1042
        %v1044 = vrcp.pop %v1043
        %v1045 = vmul.f32 %v1038, %v1044
        %1046 = vst [vmem:[#allocation3 + $0x8] sm:$0xff] %v1045
        %v1047 = vld [vmem:[#allocation2 + $0x10] sm:$0xff]
        %v1048 = vld [vmem:[#allocation2 + $0x30] sm:$0xff]
        %1049 = vmatprep.subr.mxu0 0.0
        %1050 = vmatpush1.xpose.msra.mxu0 %v1047
        %1051 = vmatprep.subr.mxu0 0.0
        %1052 = vmatpush1.xpose.msra.mxu0 0.0
        %1053 = vmatprep.subr.mxu0 0.0
        %1054 = vmatpush1.xpose.msra.mxu0 0.0
        %1055 = vmatprep.subr.mxu0 0.0
        %1056 = vmatpush1.xpose.msra.mxu0 0.0
        %1057 = vmatprep.subr.mxu0 0.0
        %1058 = vmatpush1.xpose.msra.mxu0 0.0
        %1059 = vmatprep.subr.mxu0 0.0
        %1060 = vmatpush1.xpose.msra.mxu0 0.0
        %1061 = vmatprep.subr.mxu0 0.0
        %1062 = vmatpush1.xpose.msra.mxu0 0.0
        %1063 = vmatprep.subr.mxu0 0.0
        %1064 = vmatpush1.xpose.msra.mxu0 0.0
        %1065 = vmatprep.subr.mxu0 0.0
        %1066 = vmatpush1.xpose.msra.mxu0 0.0
        %1067 = vmatprep.subr.mxu0 0.0
        %1068 = vmatpush1.xpose.msra.mxu0 0.0
        %1069 = vmatprep.subr.mxu0 0.0
        %1070 = vmatpush1.xpose.msra.mxu0 0.0
        %1071 = vmatprep.subr.mxu0 0.0
        %1072 = vmatpush1.xpose.msra.mxu0 0.0
        %1073 = vmatprep.subr.mxu0 0.0
        %1074 = vmatpush1.xpose.msra.mxu0 0.0
        %1075 = vmatprep.subr.mxu0 0.0
        %1076 = vmatpush1.xpose.msra.mxu0 0.0
        %1077 = vmatprep.subr.mxu0 0.0
        %1078 = vmatpush1.xpose.msra.mxu0 0.0
        %1079 = vmatprep.subr.mxu0 0.0
        %1080 = vmatpush1.xpose.msra.mxu0 0.0
        %1081 = vmatprep.subr.mxu0 0.0
        %1082 = vmatpush1.xpose.msra.mxu0 0.0
        %1083 = vmatprep.subr.mxu0 0.0
        %1084 = vmatpush1.xpose.msra.mxu0 0.0
        %1085 = vmatprep.subr.mxu0 0.0
        %1086 = vmatpush1.xpose.msra.mxu0 0.0
        %1087 = vmatprep.subr.mxu0 0.0
        %1088 = vmatpush1.xpose.msra.mxu0 0.0
        %1089 = vmatprep.subr.mxu0 0.0
        %1090 = vmatpush1.xpose.msra.mxu0 0.0
        %1091 = vmatprep.subr.mxu0 0.0
        %1092 = vmatpush1.xpose.msra.mxu0 0.0
        %1093 = vmatprep.subr.mxu0 0.0
        %1094 = vmatpush1.xpose.msra.mxu0 0.0
        %1095 = vmatprep.subr.mxu0 0.0
        %1096 = vmatpush1.xpose.msra.mxu0 0.0
        %1097 = vmatprep.subr.mxu0 0.0
        %1098 = vmatpush1.xpose.msra.mxu0 0.0
        %1099 = vmatprep.subr.mxu0 0.0
        %1100 = vmatpush1.xpose.msra.mxu0 0.0
        %1101 = vmatprep.subr.mxu0 0.0
        %1102 = vmatpush1.xpose.msra.mxu0 0.0
        %1103 = vmatprep.subr.mxu0 0.0
        %1104 = vmatpush1.xpose.msra.mxu0 0.0
        %1105 = vmatprep.subr.mxu0 0.0
        %1106 = vmatpush1.xpose.msra.mxu0 0.0
        %1107 = vmatprep.subr.mxu0 0.0
        %1108 = vmatpush1.xpose.msra.mxu0 0.0
        %1109 = vmatprep.subr.mxu0 0.0
        %1110 = vmatpush1.xpose.msra.mxu0 0.0
        %1111 = vmatprep.subr.mxu0 0.0
        %1112 = vmatpush1.xpose.msra.mxu0 0.0
        %1113 = vmatprep.mubr.f32.mxu0 0.0
        %1114 = vmatmul.mubr.f32.gmra.mrb[0].mxu0 %v728
        %v1115 = vpop.f32.mrb[0].mxu0
        %v1116 = vadd.f32 0.0, %v1115
        %v1117 = vpop.f32.mrb[0].mxu0
        %1118 = vdwg.mxu0
        %v1119 = vsel %vm804, %v1116, -inf
        %1120 = vmax.xlane.f32.xlu0 %v1119
        %v1121 = vpop.xlane.xlu0 %1120
        %v1122 = vsub.f32 %v1116, %v1121
        %v1123 = vmul.f32 %v1122, 1.442695
        %v1124 = vpow.pop %v1123
        %v1126 = vsel %vm804, %v1124, 0
        %1128 = vmatprep.subr.mxu0 0.0
        %1129 = vmatpush1.msra.mxu0 %v1048
        %1130 = vmatprep.subr.mxu0 0.0
        %1131 = vmatpush1.msra.mxu0 0.0
        %1132 = vmatprep.subr.mxu0 0.0
        %1133 = vmatpush1.msra.mxu0 0.0
        %1134 = vmatprep.subr.mxu0 0.0
        %1135 = vmatpush1.msra.mxu0 0.0
        %1136 = vmatprep.subr.mxu0 0.0
        %1137 = vmatpush1.msra.mxu0 0.0
        %1138 = vmatprep.subr.mxu0 0.0
        %1139 = vmatpush1.msra.mxu0 0.0
        %1140 = vmatprep.subr.mxu0 0.0
        %1141 = vmatpush1.msra.mxu0 0.0
        %1142 = vmatprep.subr.mxu0 0.0
        %1143 = vmatpush1.msra.mxu0 0.0
        %1144 = vmatprep.subr.mxu0 0.0
        %1145 = vmatpush1.msra.mxu0 0.0
        %1146 = vmatprep.subr.mxu0 0.0
        %1147 = vmatpush1.msra.mxu0 0.0
        %1148 = vmatprep.subr.mxu0 0.0
        %1149 = vmatpush1.msra.mxu0 0.0
        %1150 = vmatprep.subr.mxu0 0.0
        %1151 = vmatpush1.msra.mxu0 0.0
        %1152 = vmatprep.subr.mxu0 0.0
        %1153 = vmatpush1.msra.mxu0 0.0
        %1154 = vmatprep.subr.mxu0 0.0
        %1155 = vmatpush1.msra.mxu0 0.0
        %1156 = vmatprep.subr.mxu0 0.0
        %1157 = vmatpush1.msra.mxu0 0.0
        %1158 = vmatprep.subr.mxu0 0.0
        %1159 = vmatpush1.msra.mxu0 0.0
        %1160 = vmatprep.subr.mxu0 0.0
        %1161 = vmatpush1.msra.mxu0 0.0
        %1162 = vmatprep.subr.mxu0 0.0
        %1163 = vmatpush1.msra.mxu0 0.0
        %1164 = vmatprep.subr.mxu0 0.0
        %1165 = vmatpush1.msra.mxu0 0.0
        %1166 = vmatprep.subr.mxu0 0.0
        %1167 = vmatpush1.msra.mxu0 0.0
        %1168 = vmatprep.subr.mxu0 0.0
        %1169 = vmatpush1.msra.mxu0 0.0
        %1170 = vmatprep.subr.mxu0 0.0
        %1171 = vmatpush1.msra.mxu0 0.0
        %1172 = vmatprep.subr.mxu0 0.0
        %1173 = vmatpush1.msra.mxu0 0.0
        %1174 = vmatprep.subr.mxu0 0.0
        %1175 = vmatpush1.msra.mxu0 0.0
        %1176 = vmatprep.subr.mxu0 0.0
        %1177 = vmatpush1.msra.mxu0 0.0
        %1178 = vmatprep.subr.mxu0 0.0
        %1179 = vmatpush1.msra.mxu0 0.0
        %1180 = vmatprep.subr.mxu0 0.0
        %1181 = vmatpush1.msra.mxu0 0.0
        %1182 = vmatprep.subr.mxu0 0.0
        %1183 = vmatpush1.msra.mxu0 0.0
        %1184 = vmatprep.subr.mxu0 0.0
        %1185 = vmatpush1.msra.mxu0 0.0
        %1186 = vmatprep.subr.mxu0 0.0
        %1187 = vmatpush1.msra.mxu0 0.0
        %1188 = vmatprep.subr.mxu0 0.0
        %1189 = vmatpush1.msra.mxu0 0.0
        %1190 = vmatprep.subr.mxu0 0.0
        %1191 = vmatpush1.msra.mxu0 0.0
        %1192 = vmatprep.mubr.f32.mxu0 0.0
        %1193 = vmatmul.mubr.f32.gmra.mrb[0].mxu0 %v1126
        %v1194 = vpop.f32.mrb[0].mxu0
        %v1195 = vadd.f32 0.0, %v1194
        %v1196 = vpop.f32.mrb[0].mxu0
        %1197 = vdwg.mxu0
        %v1198 = vsel %vm804, %v1124, 0.0
        %1199 = vadd.xlane.f32.xlu0 %v1198
        %v1200 = vpop.xlane.xlu0 %1199
        %v1201 = vrcp.pop %v1200
        %v1202 = vmul.f32 %v1195, %v1201
        %1203 = vst [vmem:[#allocation3 + $0x10] sm:$0xff] %v1202
        %v1204 = vld [vmem:[#allocation2 + $0x18] sm:$0xff]
        %v1205 = vld [vmem:[#allocation2 + $0x38] sm:$0xff]
        %1206 = vmatprep.subr.mxu0 0.0
        %1207 = vmatpush1.xpose.msra.mxu0 %v1204
        %1208 = vmatprep.subr.mxu0 0.0
        %1209 = vmatpush1.xpose.msra.mxu0 0.0
        %1210 = vmatprep.subr.mxu0 0.0
        %1211 = vmatpush1.xpose.msra.mxu0 0.0
        %1212 = vmatprep.subr.mxu0 0.0
        %1213 = vmatpush1.xpose.msra.mxu0 0.0
        %1214 = vmatprep.subr.mxu0 0.0
        %1215 = vmatpush1.xpose.msra.mxu0 0.0
        %1216 = vmatprep.subr.mxu0 0.0
        %1217 = vmatpush1.xpose.msra.mxu0 0.0
        %1218 = vmatprep.subr.mxu0 0.0
        %1219 = vmatpush1.xpose.msra.mxu0 0.0
        %1220 = vmatprep.subr.mxu0 0.0
        %1221 = vmatpush1.xpose.msra.mxu0 0.0
        %1222 = vmatprep.subr.mxu0 0.0
        %1223 = vmatpush1.xpose.msra.mxu0 0.0
        %1224 = vmatprep.subr.mxu0 0.0
        %1225 = vmatpush1.xpose.msra.mxu0 0.0
        %1226 = vmatprep.subr.mxu0 0.0
        %1227 = vmatpush1.xpose.msra.mxu0 0.0
        %1228 = vmatprep.subr.mxu0 0.0
        %1229 = vmatpush1.xpose.msra.mxu0 0.0
        %1230 = vmatprep.subr.mxu0 0.0
        %1231 = vmatpush1.xpose.msra.mxu0 0.0
        %1232 = vmatprep.subr.mxu0 0.0
        %1233 = vmatpush1.xpose.msra.mxu0 0.0
        %1234 = vmatprep.subr.mxu0 0.0
        %1235 = vmatpush1.xpose.msra.mxu0 0.0
        %1236 = vmatprep.subr.mxu0 0.0
        %1237 = vmatpush1.xpose.msra.mxu0 0.0
        %1238 = vmatprep.subr.mxu0 0.0
        %1239 = vmatpush1.xpose.msra.mxu0 0.0
        %1240 = vmatprep.subr.mxu0 0.0
        %1241 = vmatpush1.xpose.msra.mxu0 0.0
        %1242 = vmatprep.subr.mxu0 0.0
        %1243 = vmatpush1.xpose.msra.mxu0 0.0
        %1244 = vmatprep.subr.mxu0 0.0
        %1245 = vmatpush1.xpose.msra.mxu0 0.0
        %1246 = vmatprep.subr.mxu0 0.0
        %1247 = vmatpush1.xpose.msra.mxu0 0.0
        %1248 = vmatprep.subr.mxu0 0.0
        %1249 = vmatpush1.xpose.msra.mxu0 0.0
        %1250 = vmatprep.subr.mxu0 0.0
        %1251 = vmatpush1.xpose.msra.mxu0 0.0
        %1252 = vmatprep.subr.mxu0 0.0
        %1253 = vmatpush1.xpose.msra.mxu0 0.0
        %1254 = vmatprep.subr.mxu0 0.0
        %1255 = vmatpush1.xpose.msra.mxu0 0.0
        %1256 = vmatprep.subr.mxu0 0.0
        %1257 = vmatpush1.xpose.msra.mxu0 0.0
        %1258 = vmatprep.subr.mxu0 0.0
        %1259 = vmatpush1.xpose.msra.mxu0 0.0
        %1260 = vmatprep.subr.mxu0 0.0
        %1261 = vmatpush1.xpose.msra.mxu0 0.0
        %1262 = vmatprep.subr.mxu0 0.0
        %1263 = vmatpush1.xpose.msra.mxu0 0.0
        %1264 = vmatprep.subr.mxu0 0.0
        %1265 = vmatpush1.xpose.msra.mxu0 0.0
        %1266 = vmatprep.subr.mxu0 0.0
        %1267 = vmatpush1.xpose.msra.mxu0 0.0
        %1268 = vmatprep.subr.mxu0 0.0
        %1269 = vmatpush1.xpose.msra.mxu0 0.0
        %1270 = vmatprep.mubr.f32.mxu0 0.0
        %1271 = vmatmul.mubr.f32.gmra.mrb[0].mxu0 %v730
        %v1272 = vpop.f32.mrb[0].mxu0
        %v1273 = vadd.f32 0.0, %v1272
        %v1274 = vpop.f32.mrb[0].mxu0
        %1275 = vdwg.mxu0
        %v1276 = vsel %vm804, %v1273, -inf
        %1277 = vmax.xlane.f32.xlu0 %v1276
        %v1278 = vpop.xlane.xlu0 %1277
        %v1279 = vsub.f32 %v1273, %v1278
        %v1280 = vmul.f32 %v1279, 1.442695
        %v1281 = vpow.pop %v1280
        %v1283 = vsel %vm804, %v1281, 0
        %1285 = vmatprep.subr.mxu0 0.0
        %1286 = vmatpush1.msra.mxu0 %v1205
        %1287 = vmatprep.subr.mxu0 0.0
        %1288 = vmatpush1.msra.mxu0 0.0
        %1289 = vmatprep.subr.mxu0 0.0
        %1290 = vmatpush1.msra.mxu0 0.0
        %1291 = vmatprep.subr.mxu0 0.0
        %1292 = vmatpush1.msra.mxu0 0.0
        %1293 = vmatprep.subr.mxu0 0.0
        %1294 = vmatpush1.msra.mxu0 0.0
        %1295 = vmatprep.subr.mxu0 0.0
        %1296 = vmatpush1.msra.mxu0 0.0
        %1297 = vmatprep.subr.mxu0 0.0
        %1298 = vmatpush1.msra.mxu0 0.0
        %1299 = vmatprep.subr.mxu0 0.0
        %1300 = vmatpush1.msra.mxu0 0.0
        %1301 = vmatprep.subr.mxu0 0.0
        %1302 = vmatpush1.msra.mxu0 0.0
        %1303 = vmatprep.subr.mxu0 0.0
        %1304 = vmatpush1.msra.mxu0 0.0
        %1305 = vmatprep.subr.mxu0 0.0
        %1306 = vmatpush1.msra.mxu0 0.0
        %1307 = vmatprep.subr.mxu0 0.0
        %1308 = vmatpush1.msra.mxu0 0.0
        %1309 = vmatprep.subr.mxu0 0.0
        %1310 = vmatpush1.msra.mxu0 0.0
        %1311 = vmatprep.subr.mxu0 0.0
        %1312 = vmatpush1.msra.mxu0 0.0
        %1313 = vmatprep.subr.mxu0 0.0
        %1314 = vmatpush1.msra.mxu0 0.0
        %1315 = vmatprep.subr.mxu0 0.0
        %1316 = vmatpush1.msra.mxu0 0.0
        %1317 = vmatprep.subr.mxu0 0.0
        %1318 = vmatpush1.msra.mxu0 0.0
        %1319 = vmatprep.subr.mxu0 0.0
        %1320 = vmatpush1.msra.mxu0 0.0
        %1321 = vmatprep.subr.mxu0 0.0
        %1322 = vmatpush1.msra.mxu0 0.0
        %1323 = vmatprep.subr.mxu0 0.0
        %1324 = vmatpush1.msra.mxu0 0.0
        %1325 = vmatprep.subr.mxu0 0.0
        %1326 = vmatpush1.msra.mxu0 0.0
        %1327 = vmatprep.subr.mxu0 0.0
        %1328 = vmatpush1.msra.mxu0 0.0
        %1329 = vmatprep.subr.mxu0 0.0
        %1330 = vmatpush1.msra.mxu0 0.0
        %1331 = vmatprep.subr.mxu0 0.0
        %1332 = vmatpush1.msra.mxu0 0.0
        %1333 = vmatprep.subr.mxu0 0.0
        %1334 = vmatpush1.msra.mxu0 0.0
        %1335 = vmatprep.subr.mxu0 0.0
        %1336 = vmatpush1.msra.mxu0 0.0
        %1337 = vmatprep.subr.mxu0 0.0
        %1338 = vmatpush1.msra.mxu0 0.0
        %1339 = vmatprep.subr.mxu0 0.0
        %1340 = vmatpush1.msra.mxu0 0.0
        %1341 = vmatprep.subr.mxu0 0.0
        %1342 = vmatpush1.msra.mxu0 0.0
        %1343 = vmatprep.subr.mxu0 0.0
        %1344 = vmatpush1.msra.mxu0 0.0
        %1345 = vmatprep.subr.mxu0 0.0
        %1346 = vmatpush1.msra.mxu0 0.0
        %1347 = vmatprep.subr.mxu0 0.0
        %1348 = vmatpush1.msra.mxu0 0.0
        %1349 = vmatprep.mubr.f32.mxu0 0.0
        %1350 = vmatmul.mubr.f32.gmra.mrb[0].mxu0 %v1283
        %v1351 = vpop.f32.mrb[0].mxu0
        %v1352 = vadd.f32 0.0, %v1351
        %v1353 = vpop.f32.mrb[0].mxu0
        %1354 = vdwg.mxu0
        %v1355 = vsel %vm804, %v1281, 0.0
        %1356 = vadd.xlane.f32.xlu0 %v1355
        %v1357 = vpop.xlane.xlu0 %1356
        %v1358 = vrcp.pop %v1357
        %v1359 = vmul.f32 %v1352, %v1358
        %1360 = vst [vmem:[#allocation3 + $0x18] sm:$0xff] %v1359
        %v1361 = vld [vmem:[#allocation3] sm:$0xff]
        %v1362 = vld [vmem:[#allocation3 + $0x8] sm:$0xff]
        %v1363 = vld [vmem:[#allocation3 + $0x10] sm:$0xff]
        %v1364 = vld [vmem:[#allocation3 + $0x18] sm:$0xff]
        %v1365 = vld [vmem:[%s3] sm:$0xff]
        %v1366 = vld [vmem:[%s3 + $0x8] sm:$0xff]
        %v1367 = vld [vmem:[%s3 + $0x10] sm:$0xff]
        %v1368 = vld [vmem:[%s3 + $0x18] sm:$0xff]
        %v1369 = vld [vmem:[%s3 + $0x20] sm:$0xff]
        %v1370 = vld [vmem:[%s3 + $0x28] sm:$0xff]
        %v1371 = vld [vmem:[%s3 + $0x30] sm:$0xff]
        %v1372 = vld [vmem:[%s3 + $0x38] sm:$0xff]
        %v1373 = vld [vmem:[%s3 + $0x40] sm:$0xff]
        %v1374 = vld [vmem:[%s3 + $0x48] sm:$0xff]
        %v1375 = vld [vmem:[%s3 + $0x50] sm:$0xff]
        %v1376 = vld [vmem:[%s3 + $0x58] sm:$0xff]
        %v1377 = vld [vmem:[%s3 + $0x60] sm:$0xff]
        %v1378 = vld [vmem:[%s3 + $0x68] sm:$0xff]
        %v1379 = vld [vmem:[%s3 + $0x70] sm:$0xff]
        %v1380 = vld [vmem:[%s3 + $0x78] sm:$0xff]
        %v1381 = vld [vmem:[%s3 + $0x80] sm:$0xff]
        %v1382 = vld [vmem:[%s3 + $0x88] sm:$0xff]
        %v1383 = vld [vmem:[%s3 + $0x90] sm:$0xff]
        %v1384 = vld [vmem:[%s3 + $0x98] sm:$0xff]
        %v1385 = vld [vmem:[%s3 + $0xa0] sm:$0xff]
        %v1386 = vld [vmem:[%s3 + $0xa8] sm:$0xff]
        %v1387 = vld [vmem:[%s3 + $0xb0] sm:$0xff]
        %v1388 = vld [vmem:[%s3 + $0xb8] sm:$0xff]
        %v1389 = vld [vmem:[%s3 + $0xc0] sm:$0xff]
        %v1390 = vld [vmem:[%s3 + $0xc8] sm:$0xff]
        %v1391 = vld [vmem:[%s3 + $0xd0] sm:$0xff]
        %v1392 = vld [vmem:[%s3 + $0xd8] sm:$0xff]
        %v1393 = vld [vmem:[%s3 + $0xe0] sm:$0xff]
        %v1394 = vld [vmem:[%s3 + $0xe8] sm:$0xff]
        %v1395 = vld [vmem:[%s3 + $0xf0] sm:$0xff]
        %v1396 = vld [vmem:[%s3 + $0xf8] sm:$0xff]
        %v1397 = vld [vmem:[%s3 + $0x100] sm:$0xff]
        %v1398 = vld [vmem:[%s3 + $0x108] sm:$0xff]
        %v1399 = vld [vmem:[%s3 + $0x110] sm:$0xff]
        %v1400 = vld [vmem:[%s3 + $0x118] sm:$0xff]
        %v1401 = vld [vmem:[%s3 + $0x120] sm:$0xff]
        %v1402 = vld [vmem:[%s3 + $0x128] sm:$0xff]
        %v1403 = vld [vmem:[%s3 + $0x130] sm:$0xff]
        %v1404 = vld [vmem:[%s3 + $0x138] sm:$0xff]
        %v1405 = vld [vmem:[%s3 + $0x140] sm:$0xff]
        %v1406 = vld [vmem:[%s3 + $0x148] sm:$0xff]
        %v1407 = vld [vmem:[%s3 + $0x150] sm:$0xff]
        %v1408 = vld [vmem:[%s3 + $0x158] sm:$0xff]
        %v1409 = vld [vmem:[%s3 + $0x160] sm:$0xff]
        %v1410 = vld [vmem:[%s3 + $0x168] sm:$0xff]
        %v1411 = vld [vmem:[%s3 + $0x170] sm:$0xff]
        %v1412 = vld [vmem:[%s3 + $0x178] sm:$0xff]
        %v1413 = vld [vmem:[%s3 + $0x180] sm:$0xff]
        %v1414 = vld [vmem:[%s3 + $0x188] sm:$0xff]
        %v1415 = vld [vmem:[%s3 + $0x190] sm:$0xff]
        %v1416 = vld [vmem:[%s3 + $0x198] sm:$0xff]
        %v1417 = vld [vmem:[%s3 + $0x1a0] sm:$0xff]
        %v1418 = vld [vmem:[%s3 + $0x1a8] sm:$0xff]
        %v1419 = vld [vmem:[%s3 + $0x1b0] sm:$0xff]
        %v1420 = vld [vmem:[%s3 + $0x1b8] sm:$0xff]
        %v1421 = vld [vmem:[%s3 + $0x1c0] sm:$0xff]
        %v1422 = vld [vmem:[%s3 + $0x1c8] sm:$0xff]
        %v1423 = vld [vmem:[%s3 + $0x1d0] sm:$0xff]
        %v1424 = vld [vmem:[%s3 + $0x1d8] sm:$0xff]
        %v1425 = vld [vmem:[%s3 + $0x1e0] sm:$0xff]
        %v1426 = vld [vmem:[%s3 + $0x1e8] sm:$0xff]
        %v1427 = vld [vmem:[%s3 + $0x1f0] sm:$0xff]
        %v1428 = vld [vmem:[%s3 + $0x1f8] sm:$0xff]
        %v1429 = vld [vmem:[%s4] sm:$0x1]
        %v1431 = vlaneseq
        %v1432 = vshrl.u32 %v1431, 7
        %v1433 = vsub.s32 0, %v1432
        %v1434 = vrot.slane %v1429, %v1433
        %1436 = vmatprep.subr.mxu0 0.0
        %1437 = vmatpush1.msra.mxu0 %v1365
        %1438 = vmatprep.subr.mxu0 0.0
        %1439 = vmatpush1.msra.mxu0 %v1366
        %1440 = vmatprep.subr.mxu0 0.0
        %1441 = vmatpush1.msra.mxu0 %v1367
        %1442 = vmatprep.subr.mxu0 0.0
        %1443 = vmatpush1.msra.mxu0 %v1368
        %1444 = vmatprep.subr.mxu0 0.0
        %1445 = vmatpush1.msra.mxu0 %v1369
        %1446 = vmatprep.subr.mxu0 0.0
        %1447 = vmatpush1.msra.mxu0 %v1370
        %1448 = vmatprep.subr.mxu0 0.0
        %1449 = vmatpush1.msra.mxu0 %v1371
        %1450 = vmatprep.subr.mxu0 0.0
        %1451 = vmatpush1.msra.mxu0 %v1372
        %1452 = vmatprep.subr.mxu0 0.0
        %1453 = vmatpush1.msra.mxu0 %v1373
        %1454 = vmatprep.subr.mxu0 0.0
        %1455 = vmatpush1.msra.mxu0 %v1374
        %1456 = vmatprep.subr.mxu0 0.0
        %1457 = vmatpush1.msra.mxu0 %v1375
        %1458 = vmatprep.subr.mxu0 0.0
        %1459 = vmatpush1.msra.mxu0 %v1376
        %1460 = vmatprep.subr.mxu0 0.0
        %1461 = vmatpush1.msra.mxu0 %v1377
        %1462 = vmatprep.subr.mxu0 0.0
        %1463 = vmatpush1.msra.mxu0 %v1378
        %1464 = vmatprep.subr.mxu0 0.0
        %1465 = vmatpush1.msra.mxu0 %v1379
        %1466 = vmatprep.subr.mxu0 0.0
        %1467 = vmatpush1.msra.mxu0 %v1380
        %1468 = vmatprep.subr.mxu0 0.0
        %1469 = vmatpush1.msra.mxu0 %v1381
        %1470 = vmatprep.subr.mxu0 0.0
        %1471 = vmatpush1.msra.mxu0 %v1382
        %1472 = vmatprep.subr.mxu0 0.0
        %1473 = vmatpush1.msra.mxu0 %v1383
        %1474 = vmatprep.subr.mxu0 0.0
        %1475 = vmatpush1.msra.mxu0 %v1384
        %1476 = vmatprep.subr.mxu0 0.0
        %1477 = vmatpush1.msra.mxu0 %v1385
        %1478 = vmatprep.subr.mxu0 0.0
        %1479 = vmatpush1.msra.mxu0 %v1386
        %1480 = vmatprep.subr.mxu0 0.0
        %1481 = vmatpush1.msra.mxu0 %v1387
        %1482 = vmatprep.subr.mxu0 0.0
        %1483 = vmatpush1.msra.mxu0 %v1388
        %1484 = vmatprep.subr.mxu0 0.0
        %1485 = vmatpush1.msra.mxu0 %v1389
        %1486 = vmatprep.subr.mxu0 0.0
        %1487 = vmatpush1.msra.mxu0 %v1390
        %1488 = vmatprep.subr.mxu0 0.0
        %1489 = vmatpush1.msra.mxu0 %v1391
        %1490 = vmatprep.subr.mxu0 0.0
        %1491 = vmatpush1.msra.mxu0 %v1392
        %1492 = vmatprep.subr.mxu0 0.0
        %1493 = vmatpush1.msra.mxu0 %v1393
        %1494 = vmatprep.subr.mxu0 0.0
        %1495 = vmatpush1.msra.mxu0 %v1394
        %1496 = vmatprep.subr.mxu0 0.0
        %1497 = vmatpush1.msra.mxu0 %v1395
        %1498 = vmatprep.subr.mxu0 0.0
        %1499 = vmatpush1.msra.mxu0 %v1396
        %1500 = vmatprep.mubr.f32.mxu0 %v1362
        %1501 = vmatmul.mubr.f32.gmra.mrb[0].mxu0 %v1361
        %v1502 = vpop.f32.mrb[0].mxu0
        %v1503 = vadd.f32 %v1434, %v1502
        %v1504 = vpop.f32.mrb[0].mxu0
        %1505 = vdwg.mxu0
        %1506 = vmatprep.subr.mxu0 0.0
        %1507 = vmatpush1.msra.mxu0 %v1397
        %1508 = vmatprep.subr.mxu0 0.0
        %1509 = vmatpush1.msra.mxu0 %v1398
        %1510 = vmatprep.subr.mxu0 0.0
        %1511 = vmatpush1.msra.mxu0 %v1399
        %1512 = vmatprep.subr.mxu0 0.0
        %1513 = vmatpush1.msra.mxu0 %v1400
        %1514 = vmatprep.subr.mxu0 0.0
        %1515 = vmatpush1.msra.mxu0 %v1401
        %1516 = vmatprep.subr.mxu0 0.0
        %1517 = vmatpush1.msra.mxu0 %v1402
        %1518 = vmatprep.subr.mxu0 0.0
        %1519 = vmatpush1.msra.mxu0 %v1403
        %1520 = vmatprep.subr.mxu0 0.0
        %1521 = vmatpush1.msra.mxu0 %v1404
        %1522 = vmatprep.subr.mxu0 0.0
        %1523 = vmatpush1.msra.mxu0 %v1405
        %1524 = vmatprep.subr.mxu0 0.0
        %1525 = vmatpush1.msra.mxu0 %v1406
        %1526 = vmatprep.subr.mxu0 0.0
        %1527 = vmatpush1.msra.mxu0 %v1407
        %1528 = vmatprep.subr.mxu0 0.0
        %1529 = vmatpush1.msra.mxu0 %v1408
        %1530 = vmatprep.subr.mxu0 0.0
        %1531 = vmatpush1.msra.mxu0 %v1409
        %1532 = vmatprep.subr.mxu0 0.0
        %1533 = vmatpush1.msra.mxu0 %v1410
        %1534 = vmatprep.subr.mxu0 0.0
        %1535 = vmatpush1.msra.mxu0 %v1411
        %1536 = vmatprep.subr.mxu0 0.0
        %1537 = vmatpush1.msra.mxu0 %v1412
        %1538 = vmatprep.subr.mxu0 0.0
        %1539 = vmatpush1.msra.mxu0 %v1413
        %1540 = vmatprep.subr.mxu0 0.0
        %1541 = vmatpush1.msra.mxu0 %v1414
        %1542 = vmatprep.subr.mxu0 0.0
        %1543 = vmatpush1.msra.mxu0 %v1415
        %1544 = vmatprep.subr.mxu0 0.0
        %1545 = vmatpush1.msra.mxu0 %v1416
        %1546 = vmatprep.subr.mxu0 0.0
        %1547 = vmatpush1.msra.mxu0 %v1417
        %1548 = vmatprep.subr.mxu0 0.0
        %1549 = vmatpush1.msra.mxu0 %v1418
        %1550 = vmatprep.subr.mxu0 0.0
        %1551 = vmatpush1.msra.mxu0 %v1419
        %1552 = vmatprep.subr.mxu0 0.0
        %1553 = vmatpush1.msra.mxu0 %v1420
        %1554 = vmatprep.subr.mxu0 0.0
        %1555 = vmatpush1.msra.mxu0 %v1421
        %1556 = vmatprep.subr.mxu0 0.0
        %1557 = vmatpush1.msra.mxu0 %v1422
        %1558 = vmatprep.subr.mxu0 0.0
        %1559 = vmatpush1.msra.mxu0 %v1423
        %1560 = vmatprep.subr.mxu0 0.0
        %1561 = vmatpush1.msra.mxu0 %v1424
        %1562 = vmatprep.subr.mxu0 0.0
        %1563 = vmatpush1.msra.mxu0 %v1425
        %1564 = vmatprep.subr.mxu0 0.0
        %1565 = vmatpush1.msra.mxu0 %v1426
        %1566 = vmatprep.subr.mxu0 0.0
        %1567 = vmatpush1.msra.mxu0 %v1427
        %1568 = vmatprep.subr.mxu0 0.0
        %1569 = vmatpush1.msra.mxu0 %v1428
        %1570 = vmatprep.mubr.f32.mxu0 %v1364
        %1571 = vmatmul.mubr.f32.gmra.mrb[0].mxu0 %v1363
        %v1572 = vpop.f32.mrb[0].mxu0
        %v1573 = vadd.f32 %v1503, %v1572
        %v1574 = vpop.f32.mrb[0].mxu0
        %1575 = vdwg.mxu0
        %1576 = vst.msk [vmem:[%s229] sm:$0xff] %vm586, %v1573
        %s1577 = sand.u32 %s151, 1
        %s1578 = scalar_lea.sflag [#allocation5], %s1577
        %s1579 = sand.u32 %s151, 1
        %s1580 = smul.addr %s1579, 8
        %s1581 = scalar_lea.vmem [#allocation4], %s1580
        // Predicated region
        $region45: #{tpu_custom_call.1} parent=39 // pred_check
          %p1582 = pneg %p161
        $region46: #{tpu_custom_call.1} parent=39 // pred_check_branch
          %1584 = sbr.rel (%p1582) target = $region48
        $region47: #{tpu_custom_call.1} parent=39 // pred_region
          %s1586 = ssub.s32 128, 128
          %1587 = vsyncadd %s1578, %s1586
          %s1588 = sadd.s32 %s24, %s23
          %s1589 = smul.addr %s1588, 128
          %s1590 = scalar_lea.hbm %s5, %s1589
          %s1592 = sshll.u32 %s1581, 4
          %s1593 = int_to_ptr.vmem [resolvable:$true] %s1592
          %1595 = dma.vmem_to_hbm [thread:$0]  %s1593, 128, %s1590, %s1578
        $region48: #{tpu_custom_call.1} parent=39 // pred_fallthru
          _
      $region40: #{tpu_custom_call.1} parent=5 // pred_fallthru
        _
      %p1596 = scmp.le.s32.totalorder 2, %s14
      // Predicated region
      $region49: #{tpu_custom_call.1} parent=5 // pred_check
        %p1597 = pneg %p1596
      $region50: #{tpu_custom_call.1} parent=5 // pred_check_branch
        %1599 = sbr.rel (%p1597) target = $region52
      $region51: #{tpu_custom_call.1} parent=5 // pred_region
        %s1600 = ssub.s32 %s14, 2
        // Predicated region
        $region53: #{tpu_custom_call.1} parent=51 // pred_check
          %p1601 = pneg %p167
        $region54: #{tpu_custom_call.1} parent=51 // pred_check_branch
          %1603 = sbr.rel (%p1601) target = $region56
        $region55: #{tpu_custom_call.1} parent=51 // pred_region
          %s1604 = sand.u32 %s152, 1
          %s1605 = scalar_lea.sflag [#allocation5], %s1604
          %s1606 = sand.u32 %s152, 1
          %s1607 = smul.addr %s1606, 8
          %s1608 = scalar_lea.vmem [#allocation4], %s1607
          %1609 = dma.done %s1605, 128
        $region56: #{tpu_custom_call.1} parent=51 // pred_fallthru
          _
      $region52: #{tpu_custom_call.1} parent=5 // pred_fallthru
        _
    $region6: #{tpu_custom_call.1} parent=1 // loop_footer
      %s18 = sadd.s32 1, %s14
    $region7: #{tpu_custom_call.1} parent=1 // loop_footer_branch
      %13 = sbr.rel target = $region3
    $region8: #{tpu_custom_call.1} parent=1 // loop_exit
      _
    %1610 = vsyncpa [#allocation5], 1
    %s1611 = scalar_lea.sflag [#allocation5], 1
    %1612 = vsyncpa %s1611, 1

</llo_original>
